<compile_context>
chip_gen: v7x
topology: tpu7x:2x2x1
jax: 0.10.0
libtpu: 0.0.40
codegen_flags: <defaults>
</compile_context>

<pallas_src>
import functools

import jax
import jax.numpy as jnp
import numpy as np
from jax.experimental import pallas as pl
from jax.experimental.pallas import tpu as pltpu


# -----------------------------------------------------------------------------
# Pallas kernel 1: fused im2col conv + bias + LeakyReLU(0.2)
#   x_ref : (1, Cin, Lp)  bf16   flat padded image (lane axis = flat spatial)
#   w_ref : (ks*ks, Cout, Cin) bf16
#   b_ref : (Cout, 1)     f32
#   o_ref : (1, Cout, M)  bf16   M = H * Wp (garbage cols at w>=W sliced off in wrapper)
# -----------------------------------------------------------------------------
def _conv_kernel(x_ref, w_ref, b_ref, o_ref, *, taps, m, act, neg_slope):
    cout = w_ref.shape[1]
    acc = jnp.zeros((cout, m), jnp.float32)
    for t, off in enumerate(taps):                       # ks*ks static shifted views
        xs = x_ref[0, :, pl.ds(off, m)]                  # (Cin, m) bf16, VMEM-local shift
        acc = acc + jnp.dot(w_ref[t], xs, preferred_element_type=jnp.float32)
    acc = acc + b_ref[...]                               # f32 epilogue (v5e has no bf16 VPU)
    if act:
        acc = jnp.where(acc >= 0, acc, acc * neg_slope)
    o_ref[0] = acc.astype(o_ref.dtype)


@functools.partial(jax.jit, static_argnames=("stride", "act"))
def conv2d(x, p, stride=1, act=True):
    """PyTorch-equivalent Conv2d(padding=ks//2) [+ LeakyReLU(0.2)], NCHW, bf16 activations."""
    wgt, bias = p["w"], p["b"]
    ks, _, cin, cout = wgt.shape
    B, C, H, W = x.shape
    # pad channels to a multiple of 8 (sublane alignment; avoids degenerate K=1 matmuls)
    cin_p = ((cin + 7) // 8) * 8
    if cin_p != cin:
        x = jnp.pad(x, ((0, 0), (0, cin_p - cin), (0, 0), (0, 0)))
        wgt = jnp.pad(wgt, ((0, 0), (0, 0), (0, cin_p - cin), (0, 0)))
    pad = ks // 2
    Hp, Wp = H + 2 * pad, W + 2 * pad
    Lp = Hp * Wp + (ks - 1)            # flat padded length (covers the largest tap offset)
    M = H * Wp                         # accumulator rows (row stride Wp; cols >= W discarded)

    xf = jnp.pad(x.astype(jnp.bfloat16), ((0, 0), (0, 0), (pad, pad), (pad, pad)))
    xf = xf.reshape(B, cin_p, Hp * Wp)
    xf = jnp.pad(xf, ((0, 0), (0, 0), (0, Lp - Hp * Wp)))
    wt = jnp.transpose(wgt, (0, 1, 3, 2)).reshape(ks * ks, cout, cin_p).astype(jnp.bfloat16)
    bt = bias.reshape(cout, 1).astype(jnp.float32)
    taps = tuple(dy * Wp + dx for dy in range(ks) for dx in range(ks))

    kernel = functools.partial(_conv_kernel, taps=taps, m=M, act=act, neg_slope=0.2)
    out = pl.pallas_call(
        kernel,
        out_shape=jax.ShapeDtypeStruct((B, cout, M), jnp.bfloat16),
        grid=(B,),
        in_specs=[
            pl.BlockSpec((1, cin_p, Lp), lambda b: (b, 0, 0)),
            pl.BlockSpec((ks * ks, cout, cin_p), lambda b: (0, 0, 0)),
            pl.BlockSpec((cout, 1), lambda b: (0, 0)),
        ],
        out_specs=pl.BlockSpec((1, cout, M), lambda b: (b, 0, 0)),
        compiler_params=pltpu.CompilerParams(dimension_semantics=("parallel",)),
    )(xf, wt, bt)

    y = out.reshape(B, cout, H, Wp)[:, :, :, :W]
    if stride > 1:
        # TODO(synk): stride-2 (single small layer) is handled by subsampling the dense
        #             stride-1 output; a phase-decomposed strided kernel would avoid the
        #             4x extra MXU work.
        y = y[:, :, ::stride, ::stride]
    return y


# -----------------------------------------------------------------------------
# Pallas kernel 2: patch correlation + running max / argmax over key positions
#   q_ref : (1, D, TM)  bf16   (queries on lanes)
#   k_ref : (1, TN, D)  bf16
#   conf/idx outputs   : (1, 1, TM)  (lane-dense, M on lanes)
#   conf_s/idx_s scratch: (1, TM) f32 / int32 running state
# -----------------------------------------------------------------------------
def _match_kernel(q_ref, k_ref, conf_ref, idx_ref, conf_s, idx_s):
    j = pl.program_id(2)
    tn = k_ref.shape[1]

    @pl.when(j == 0)
    def _():
        conf_s[...] = jnp.full(conf_s.shape, -1e30, jnp.float32)   # keep state in f32
        idx_s[...] = jnp.zeros(idx_s.shape, jnp.int32)

    s = jnp.dot(k_ref[0], q_ref[0], preferred_element_type=jnp.float32)   # (TN, TM)
    local_max = jnp.max(s, axis=0, keepdims=True)                          # (1, TM)
    row = jax.lax.broadcasted_iota(jnp.int32, s.shape, 0)
    masked = jnp.where(s >= local_max, row, jnp.int32(2 ** 30))
    local_arg = jnp.min(masked, axis=0, keepdims=True) + j * tn            # (1, TM)

    upd = local_max > conf_s[...]          # strict '>' keeps first-occurrence ties
    idx_s[...] = jnp.where(upd, local_arg, idx_s[...])
    conf_s[...] = jnp.where(upd, local_max, conf_s[...])

    @pl.when(j == pl.num_programs(2) - 1)
    def _():
        conf_ref[0] = conf_s[...]
        idx_ref[0] = idx_s[...]


@jax.jit
def pallas_match(qn, kn):
    """qn: (B, D, M) bf16 normalized query patches (queries on lanes);
    kn: (B, Nk, D) bf16 normalized key patches.  Returns (conf (B,M) f32, idx (B,M) i32)."""
    B, D, M = qn.shape
    Nk = kn.shape[1]
    TM = 256 if M % 256 == 0 else (128 if M % 128 == 0 else M)
    TN = 256 if Nk % 256 == 0 else (128 if Nk % 128 == 0 else Nk)   # 256 fills v6e/v7x MXU
    conf, idx = pl.pallas_call(
        _match_kernel,
        out_shape=(
            jax.ShapeDtypeStruct((B, 1, M), jnp.float32),
            jax.ShapeDtypeStruct((B, 1, M), jnp.int32),
        ),
        grid=(B, M // TM, Nk // TN),
        in_specs=[
            pl.BlockSpec((1, D, TM), lambda b, m, j: (b, 0, m)),
            pl.BlockSpec((1, TN, D), lambda b, m, j: (b, j, 0)),
        ],
        out_specs=(
            pl.BlockSpec((1, 1, TM), lambda b, m, j: (b, 0, m)),
            pl.BlockSpec((1, 1, TM), lambda b, m, j: (b, 0, m)),
        ),
        scratch_shapes=[pltpu.VMEM((1, TM), jnp.float32),
                        pltpu.VMEM((1, TM), jnp.int32)],
        compiler_params=pltpu.CompilerParams(
            dimension_semantics=("parallel", "parallel", "arbitrary")),
    )(qn, kn)
    return conf[:, 0, :], idx[:, 0, :]


# -----------------------------------------------------------------------------
# Pallas kernel 3: one-hot gather of matched value blocks (AlignedAttention core)
#   v_ref  : (1, Css, Nk) bf16   value blocks (Css = C*s*s) with key index on lanes
#   idx_ref: (1, 1, M)    int32  matched key index per query position
#   o_ref  : (1, Css, M)  bf16
# -----------------------------------------------------------------------------
def _gather_kernel(v_ref, idx_ref, o_ref):
    nk = v_ref.shape[2]
    m = idx_ref.shape[2]
    iota = jax.lax.broadcasted_iota(jnp.int32, (nk, m), 0)
    oh = (iota == idx_ref[0]).astype(v_ref.dtype)                        # (Nk, M) one-hot
    o_ref[0] = jnp.dot(v_ref[0], oh,
                       preferred_element_type=jnp.float32).astype(o_ref.dtype)


@jax.jit
def pallas_onehot_gather(vb, idx):
    """vb: (B, Css, Nk) bf16; idx: (B, 1, M) int32 -> (B, Css, M) bf16 exact gather."""
    B, Css, Nk = vb.shape
    M = idx.shape[2]
    return pl.pallas_call(
        _gather_kernel,
        out_shape=jax.ShapeDtypeStruct((B, Css, M), jnp.bfloat16),
        grid=(B,),
        in_specs=[
            pl.BlockSpec((1, Css, Nk), lambda b: (b, 0, 0)),
            pl.BlockSpec((1, 1, M), lambda b: (b, 0, 0)),
        ],
        out_specs=pl.BlockSpec((1, Css, M), lambda b: (b, 0, 0)),
        compiler_params=pltpu.CompilerParams(dimension_semantics=("parallel",)),
    )(vb, idx)
    # TODO(synk): for very large images a scalar-prefetch DMA gather would beat the
    #             O(M*Nk) one-hot matmul; at these grid sizes the MXU path is free.


# -----------------------------------------------------------------------------
# Glue: pooling, resize, unfold (for matching only), aligned attention wrapper
# -----------------------------------------------------------------------------
def avgpool2(x):
    B, C, H, W = x.shape
    return x.reshape(B, C, H // 2, 2, W // 2, 2).mean(axis=(3, 5))


def resize2x(x):
    B, C, H, W = x.shape
    y = jax.image.resize(x.astype(jnp.float32), (B, C, 2 * H, 2 * W), method="bicubic")
    return y.astype(jnp.bfloat16)


def unfold_cf(x, ks):
    """x: (B, C, H, W) -> (B, ks*ks*C, H*W) patch vectors (only used for matching Q/K)."""
    B, C, H, W = x.shape
    pad = ks // 2
    xp = jnp.pad(x, ((0, 0), (0, 0), (pad, pad), (pad, pad)))
    cols = [xp[:, :, dy:dy + H, dx:dx + W] for dy in range(ks) for dx in range(ks)]
    return jnp.concatenate(cols, axis=1).reshape(B, ks * ks * C, H * W)


def aligned_attention(index_map, value, scale):
    """Warp `value` by copying the scale x scale block at the matched key location to the
    corresponding query location (exact same semantics as the previous gather version)."""
    B, C, Hs, Ws = value.shape
    s = scale
    H, W = Hs // s, Ws // s
    Hq, Wq = index_map.shape[1], index_map.shape[2]
    vb = value.reshape(B, C, H, s, W, s).transpose(0, 1, 3, 5, 2, 4)
    vb = vb.reshape(B, C * s * s, H * W).astype(jnp.bfloat16)
    idx = index_map.reshape(B, 1, Hq * Wq).astype(jnp.int32)
    g = pallas_onehot_gather(vb, idx)                                   # (B, C*s*s, Hq*Wq)
    out = g.reshape(B, C, s, s, Hq, Wq).transpose(0, 1, 4, 2, 5, 3)
    return out.reshape(B, C, Hq * s, Wq * s)


# -----------------------------------------------------------------------------
# Network blocks
# -----------------------------------------------------------------------------
def res_block(x, p):
    r = conv2d(x, p["c1"], act=True)
    r = conv2d(r, p["c2"], act=False)
    return x + r


def res_list(x, plist):
    for p in plist:
        x = res_block(x, p)
    return x


def encoder_input(x, p):
    y = conv2d(x, p["head"], act=True)
    y = res_list(y, p["body"])
    y = conv2d(y, p["tail"], act=False)
    return y


def alpha_branch(x, p):
    return conv2d(conv2d(x, p[0], act=True), p[1], act=True)


def fusion_branch(x, p):
    return conv2d(conv2d(x, p[0], act=True), p[1], act=True)


def feature_matching(inp, ref_p, p):
    """Returns (confidence_map (B,1,H,W) bf16, index_map (B,H,W) int32 over the key grid)."""
    B, _, H, W = inp.shape
    fq = conv2d(conv2d(inp, p["fe1"], act=True), p["fe2"], act=True)             # (B,64,H,W)
    fk = conv2d(conv2d(avgpool2(ref_p), p["fe1"], act=True), p["fe2"], act=True)
    Q = unfold_cf(fq, 3).astype(jnp.float32)                                     # (B, D, M)
    K = unfold_cf(fk, 3).astype(jnp.float32)                                     # (B, D, Nk)
    Qn = Q / (jnp.linalg.norm(Q, axis=1, keepdims=True) + 1e-6)                  # f32 norms
    Kn = K / (jnp.linalg.norm(K, axis=1, keepdims=True) + 1e-6)
    conf, idx = pallas_match(Qn.astype(jnp.bfloat16),
                             jnp.swapaxes(Kn, 1, 2).astype(jnp.bfloat16))
    return conf.reshape(B, 1, H, W).astype(jnp.bfloat16), idx.reshape(B, H, W)


# -----------------------------------------------------------------------------
# DCSR forward (coarse=False, flag_8k=False), NCHW
# -----------------------------------------------------------------------------
def dcsr_forward(params, inp, ref):
    inp = inp.astype(jnp.bfloat16)
    ref = ref.astype(jnp.bfloat16)
    ref_p = ref  # coarse == False path

    confidence_map, index_map = feature_matching(inp, ref_p, params["fm"])

    ref_downsampled = avgpool2(ref_p)
    ref_hf = ref_p - resize2x(ref_downsampled)
    ref_hf_aligned = aligned_attention(index_map, ref_hf, scale=2)                    # aa1

    ref_features1 = conv2d(ref_p, params["enc1"][0], act=True)
    ref_features1 = conv2d(ref_features1, params["enc1"][1], act=True)
    ref_features1 = res_list(ref_features1, params["res1"])
    ref_features2 = conv2d(ref_features1, params["enc2"][0], stride=2, act=True)
    ref_features2 = conv2d(ref_features2, params["enc2"][1], act=True)
    ref_features2 = res_list(ref_features2, params["res2"])

    ref_features_matched = aligned_attention(index_map, ref_features2, scale=1)       # aa2
    ref_features_aligned = aligned_attention(index_map, ref_features1, scale=2)       # aa3

    input_up = encoder_input(inp, params["inenc"])

    cat_features = jnp.concatenate([ref_features_matched, input_up], axis=1)
    fused_features2 = (alpha_branch(confidence_map, params["alpha1"])
                       * fusion_branch(cat_features, params["fusion1"]) + input_up)
    fused_features2 = res_list(fused_features2, params["decoder1"])

    fused_features2_up = resize2x(fused_features2)
    confidence_map_up = resize2x(confidence_map)
    cat_features = jnp.concatenate([ref_features_aligned, fused_features2_up], axis=1)
    fused_features1 = (alpha_branch(confidence_map_up, params["alpha2"])
                       * fusion_branch(cat_features, params["fusion2"]) + fused_features2_up)
    fused_features1 = res_list(fused_features1, params["decoder2"])

    tail = conv2d(conv2d(fused_features1, params["tail"][0], act=True),
                  params["tail"][1], act=False)
    a3 = alpha_branch(jnp.concatenate([confidence_map_up, ref_hf_aligned], axis=1),
                      params["alpha3"])
    result = tail + ref_hf_aligned * a3
    return result.astype(jnp.float32)


# -----------------------------------------------------------------------------
# Deterministic parameter init
# -----------------------------------------------------------------------------
class KeyGen:
    def __init__(self, seed=0):
        self.base = jax.random.PRNGKey(seed)
        self.i = 0

    def __call__(self):
        self.i += 1
        return jax.random.fold_in(self.base, self.i)


def conv_params(key, cin, cout, ks):
    k1, k2 = jax.random.split(key)
    fan_in = cin * ks * ks
    w = jax.random.normal(k1, (ks, ks, cin, cout), jnp.float32) / np.sqrt(fan_in)
    b = jax.random.normal(k2, (cout,), jnp.float32) * 0.01
    return {"w": w, "b": b}


def res_params(kg, n_feats):
    return {"c1": conv_params(kg(), n_feats, n_feats, 3),
            "c2": conv_params(kg(), n_feats, n_feats, 3)}


def init_params(n_feats=16, n_colors=3):
    kg = KeyGen(0)
    P = {}
    P["fm"] = {"fe1": conv_params(kg(), n_colors, 64, 3),
               "fe2": conv_params(kg(), 64, 64, 3)}
    P["enc1"] = [conv_params(kg(), n_colors, n_feats, 3),
                 conv_params(kg(), n_feats, n_feats, 3)]
    P["enc2"] = [conv_params(kg(), n_feats, n_feats, 3),
                 conv_params(kg(), n_feats, n_feats, 3)]
    P["res1"] = [res_params(kg, n_feats) for _ in range(4)]
    P["res2"] = [res_params(kg, n_feats) for _ in range(4)]
    P["inenc"] = {"head": conv_params(kg(), n_colors, n_feats, 3),
                  "body": [res_params(kg, n_feats) for _ in range(8)],
                  "tail": conv_params(kg(), n_feats, n_feats, 3)}
    P["fusion1"] = [conv_params(kg(), 2 * n_feats, n_feats, 5),
                    conv_params(kg(), n_feats, n_feats, 3)]
    P["decoder1"] = [res_params(kg, n_feats) for _ in range(8)]
    P["fusion2"] = [conv_params(kg(), 2 * n_feats, n_feats, 5),
                    conv_params(kg(), n_feats, n_feats, 3)]
    P["decoder2"] = [res_params(kg, n_feats) for _ in range(4)]
    P["tail"] = [conv_params(kg(), n_feats, n_feats // 2, 3),
                 conv_params(kg(), n_feats // 2, n_colors, 3)]
    P["alpha1"] = [conv_params(kg(), 1, 16, 7), conv_params(kg(), 16, n_feats, 3)]
    P["alpha2"] = [conv_params(kg(), 1, 16, 7), conv_params(kg(), 16, n_feats, 3)]
    P["alpha3"] = [conv_params(kg(), 4, 32, 7), conv_params(kg(), 32, 3, 3)]
    return P


# -----------------------------------------------------------------------------
if __name__ == "__main__":
    n_feats, n_colors = 16, 3
    B, H, W = 2, 16, 16

    params = init_params(n_feats, n_colors)

    key = jax.random.PRNGKey(0)
    k1, k2 = jax.random.split(key)
    # PyTorch-convention NCHW inputs (kernels also run channels-first).
    inp = jax.random.uniform(k1, (B, n_colors, H, W), jnp.float32)
    ref = jax.random.uniform(k2, (B, n_colors, 2 * H, 2 * W), jnp.float32)

    out = dcsr_forward(params, inp, ref)
    out = jax.block_until_ready(out)
    assert out.shape == (B, n_colors, 2 * H, 2 * W), out.shape
    assert bool(jnp.all(jnp.isfinite(out)))
    print("KERNEL_OK")
</pallas_src>

<mosaic_0001>
module attributes {stable_mosaic.version = 11 : i64} {
  func.func @_conv_kernel(%arg0: i32, %arg1: memref<1x8x326xbf16, #tpu.memory_space<vmem>>, %arg2: memref<9x64x8xbf16, #tpu.memory_space<vmem>>, %arg3: memref<64x1xf32, #tpu.memory_space<vmem>>, %arg4: memref<1x64x288xbf16, #tpu.memory_space<vmem>>) attributes {dimension_semantics = [#tpu.dimension_semantics<parallel>], iteration_bounds = array<i64: 2>, scalar_prefetch = 0 : i64, scratch_operands = 0 : i64, tpu.core_type = #tpu.core_type<tc>, window_params = [{transform_indices = @transform_0, window_bounds = array<i64: 1, 8, 326>}, {pipeline_mode = #tpu.pipeline_mode<synchronous>, transform_indices = @transform_1, window_bounds = array<i64: 9, 64, 8>}, {pipeline_mode = #tpu.pipeline_mode<synchronous>, transform_indices = @transform_2, window_bounds = array<i64: 64, 1>}, {transform_indices = @transform_3, window_bounds = array<i64: 1, 64, 288>}]} {
    %cst = arith.constant 0.000000e+00 : f32
    %0 = vector.broadcast %cst : f32 to vector<64x288xf32>
    %c0 = arith.constant 0 : index
    %c0_0 = arith.constant 0 : index
    %c0_1 = arith.constant 0 : index
    %1 = vector.load %arg1[%c0, %c0_0, %c0_1] : memref<1x8x326xbf16, #tpu.memory_space<vmem>>, vector<1x8x288xbf16>
    %2 = vector.shape_cast %1 : vector<1x8x288xbf16> to vector<8x288xbf16>
    %c0_2 = arith.constant 0 : index
    %c0_3 = arith.constant 0 : index
    %c0_4 = arith.constant 0 : index
    %3 = vector.load %arg2[%c0_2, %c0_3, %c0_4] : memref<9x64x8xbf16, #tpu.memory_space<vmem>>, vector<1x64x8xbf16>
    %4 = vector.shape_cast %3 : vector<1x64x8xbf16> to vector<64x8xbf16>
    %cst_5 = arith.constant dense<0.000000e+00> : vector<64x288xf32>
    %5 = tpu.matmul %4, %2, %cst_5 {dimension_numbers = #tpu.dot_dimension_numbers<[1], [0], [0], [1], [0, 0, 1, 1], [], []>} : vector<64x8xbf16>, vector<8x288xbf16>, vector<64x288xf32> -> vector<64x288xf32>
    %6 = arith.addf %0, %5 : vector<64x288xf32>
    %c0_6 = arith.constant 0 : index
    %c0_7 = arith.constant 0 : index
    %c1 = arith.constant 1 : index
    %7 = vector.load %arg1[%c0_6, %c0_7, %c1] : memref<1x8x326xbf16, #tpu.memory_space<vmem>>, vector<1x8x288xbf16>
    %8 = vector.shape_cast %7 : vector<1x8x288xbf16> to vector<8x288xbf16>
    %c1_8 = arith.constant 1 : index
    %c0_9 = arith.constant 0 : index
    %c0_10 = arith.constant 0 : index
    %9 = vector.load %arg2[%c1_8, %c0_9, %c0_10] : memref<9x64x8xbf16, #tpu.memory_space<vmem>>, vector<1x64x8xbf16>
    %10 = vector.shape_cast %9 : vector<1x64x8xbf16> to vector<64x8xbf16>
    %cst_11 = arith.constant dense<0.000000e+00> : vector<64x288xf32>
    %11 = tpu.matmul %10, %8, %cst_11 {dimension_numbers = #tpu.dot_dimension_numbers<[1], [0], [0], [1], [0, 0, 1, 1], [], []>} : vector<64x8xbf16>, vector<8x288xbf16>, vector<64x288xf32> -> vector<64x288xf32>
    %12 = arith.addf %6, %11 : vector<64x288xf32>
    %c0_12 = arith.constant 0 : index
    %c0_13 = arith.constant 0 : index
    %c2 = arith.constant 2 : index
    %13 = vector.load %arg1[%c0_12, %c0_13, %c2] : memref<1x8x326xbf16, #tpu.memory_space<vmem>>, vector<1x8x288xbf16>
    %14 = vector.shape_cast %13 : vector<1x8x288xbf16> to vector<8x288xbf16>
    %c2_14 = arith.constant 2 : index
    %c0_15 = arith.constant 0 : index
    %c0_16 = arith.constant 0 : index
    %15 = vector.load %arg2[%c2_14, %c0_15, %c0_16] : memref<9x64x8xbf16, #tpu.memory_space<vmem>>, vector<1x64x8xbf16>
    %16 = vector.shape_cast %15 : vector<1x64x8xbf16> to vector<64x8xbf16>
    %cst_17 = arith.constant dense<0.000000e+00> : vector<64x288xf32>
    %17 = tpu.matmul %16, %14, %cst_17 {dimension_numbers = #tpu.dot_dimension_numbers<[1], [0], [0], [1], [0, 0, 1, 1], [], []>} : vector<64x8xbf16>, vector<8x288xbf16>, vector<64x288xf32> -> vector<64x288xf32>
    %18 = arith.addf %12, %17 : vector<64x288xf32>
    %c0_18 = arith.constant 0 : index
    %c0_19 = arith.constant 0 : index
    %c18 = arith.constant 18 : index
    %19 = vector.load %arg1[%c0_18, %c0_19, %c18] : memref<1x8x326xbf16, #tpu.memory_space<vmem>>, vector<1x8x288xbf16>
    %20 = vector.shape_cast %19 : vector<1x8x288xbf16> to vector<8x288xbf16>
    %c3 = arith.constant 3 : index
    %c0_20 = arith.constant 0 : index
    %c0_21 = arith.constant 0 : index
    %21 = vector.load %arg2[%c3, %c0_20, %c0_21] : memref<9x64x8xbf16, #tpu.memory_space<vmem>>, vector<1x64x8xbf16>
    %22 = vector.shape_cast %21 : vector<1x64x8xbf16> to vector<64x8xbf16>
    %cst_22 = arith.constant dense<0.000000e+00> : vector<64x288xf32>
    %23 = tpu.matmul %22, %20, %cst_22 {dimension_numbers = #tpu.dot_dimension_numbers<[1], [0], [0], [1], [0, 0, 1, 1], [], []>} : vector<64x8xbf16>, vector<8x288xbf16>, vector<64x288xf32> -> vector<64x288xf32>
    %24 = arith.addf %18, %23 : vector<64x288xf32>
    %c0_23 = arith.constant 0 : index
    %c0_24 = arith.constant 0 : index
    %c19 = arith.constant 19 : index
    %25 = vector.load %arg1[%c0_23, %c0_24, %c19] : memref<1x8x326xbf16, #tpu.memory_space<vmem>>, vector<1x8x288xbf16>
    %26 = vector.shape_cast %25 : vector<1x8x288xbf16> to vector<8x288xbf16>
    %c4 = arith.constant 4 : index
    %c0_25 = arith.constant 0 : index
    %c0_26 = arith.constant 0 : index
    %27 = vector.load %arg2[%c4, %c0_25, %c0_26] : memref<9x64x8xbf16, #tpu.memory_space<vmem>>, vector<1x64x8xbf16>
    %28 = vector.shape_cast %27 : vector<1x64x8xbf16> to vector<64x8xbf16>
    %cst_27 = arith.constant dense<0.000000e+00> : vector<64x288xf32>
    %29 = tpu.matmul %28, %26, %cst_27 {dimension_numbers = #tpu.dot_dimension_numbers<[1], [0], [0], [1], [0, 0, 1, 1], [], []>} : vector<64x8xbf16>, vector<8x288xbf16>, vector<64x288xf32> -> vector<64x288xf32>
    %30 = arith.addf %24, %29 : vector<64x288xf32>
    %c0_28 = arith.constant 0 : index
    %c0_29 = arith.constant 0 : index
    %c20 = arith.constant 20 : index
    %31 = vector.load %arg1[%c0_28, %c0_29, %c20] : memref<1x8x326xbf16, #tpu.memory_space<vmem>>, vector<1x8x288xbf16>
    %32 = vector.shape_cast %31 : vector<1x8x288xbf16> to vector<8x288xbf16>
    %c5 = arith.constant 5 : index
    %c0_30 = arith.constant 0 : index
    %c0_31 = arith.constant 0 : index
    %33 = vector.load %arg2[%c5, %c0_30, %c0_31] : memref<9x64x8xbf16, #tpu.memory_space<vmem>>, vector<1x64x8xbf16>
    %34 = vector.shape_cast %33 : vector<1x64x8xbf16> to vector<64x8xbf16>
    %cst_32 = arith.constant dense<0.000000e+00> : vector<64x288xf32>
    %35 = tpu.matmul %34, %32, %cst_32 {dimension_numbers = #tpu.dot_dimension_numbers<[1], [0], [0], [1], [0, 0, 1, 1], [], []>} : vector<64x8xbf16>, vector<8x288xbf16>, vector<64x288xf32> -> vector<64x288xf32>
    %36 = arith.addf %30, %35 : vector<64x288xf32>
    %c0_33 = arith.constant 0 : index
    %c0_34 = arith.constant 0 : index
    %c36 = arith.constant 36 : index
    %37 = vector.load %arg1[%c0_33, %c0_34, %c36] : memref<1x8x326xbf16, #tpu.memory_space<vmem>>, vector<1x8x288xbf16>
    %38 = vector.shape_cast %37 : vector<1x8x288xbf16> to vector<8x288xbf16>
    %c6 = arith.constant 6 : index
    %c0_35 = arith.constant 0 : index
    %c0_36 = arith.constant 0 : index
    %39 = vector.load %arg2[%c6, %c0_35, %c0_36] : memref<9x64x8xbf16, #tpu.memory_space<vmem>>, vector<1x64x8xbf16>
    %40 = vector.shape_cast %39 : vector<1x64x8xbf16> to vector<64x8xbf16>
    %cst_37 = arith.constant dense<0.000000e+00> : vector<64x288xf32>
    %41 = tpu.matmul %40, %38, %cst_37 {dimension_numbers = #tpu.dot_dimension_numbers<[1], [0], [0], [1], [0, 0, 1, 1], [], []>} : vector<64x8xbf16>, vector<8x288xbf16>, vector<64x288xf32> -> vector<64x288xf32>
    %42 = arith.addf %36, %41 : vector<64x288xf32>
    %c0_38 = arith.constant 0 : index
    %c0_39 = arith.constant 0 : index
    %c37 = arith.constant 37 : index
    %43 = vector.load %arg1[%c0_38, %c0_39, %c37] : memref<1x8x326xbf16, #tpu.memory_space<vmem>>, vector<1x8x288xbf16>
    %44 = vector.shape_cast %43 : vector<1x8x288xbf16> to vector<8x288xbf16>
    %c7 = arith.constant 7 : index
    %c0_40 = arith.constant 0 : index
    %c0_41 = arith.constant 0 : index
    %45 = vector.load %arg2[%c7, %c0_40, %c0_41] : memref<9x64x8xbf16, #tpu.memory_space<vmem>>, vector<1x64x8xbf16>
    %46 = vector.shape_cast %45 : vector<1x64x8xbf16> to vector<64x8xbf16>
    %cst_42 = arith.constant dense<0.000000e+00> : vector<64x288xf32>
    %47 = tpu.matmul %46, %44, %cst_42 {dimension_numbers = #tpu.dot_dimension_numbers<[1], [0], [0], [1], [0, 0, 1, 1], [], []>} : vector<64x8xbf16>, vector<8x288xbf16>, vector<64x288xf32> -> vector<64x288xf32>
    %48 = arith.addf %42, %47 : vector<64x288xf32>
    %c0_43 = arith.constant 0 : index
    %c0_44 = arith.constant 0 : index
    %c38 = arith.constant 38 : index
    %49 = vector.load %arg1[%c0_43, %c0_44, %c38] : memref<1x8x326xbf16, #tpu.memory_space<vmem>>, vector<1x8x288xbf16>
    %50 = vector.shape_cast %49 : vector<1x8x288xbf16> to vector<8x288xbf16>
    %c8 = arith.constant 8 : index
    %c0_45 = arith.constant 0 : index
    %c0_46 = arith.constant 0 : index
    %51 = vector.load %arg2[%c8, %c0_45, %c0_46] : memref<9x64x8xbf16, #tpu.memory_space<vmem>>, vector<1x64x8xbf16>
    %52 = vector.shape_cast %51 : vector<1x64x8xbf16> to vector<64x8xbf16>
    %cst_47 = arith.constant dense<0.000000e+00> : vector<64x288xf32>
    %53 = tpu.matmul %52, %50, %cst_47 {dimension_numbers = #tpu.dot_dimension_numbers<[1], [0], [0], [1], [0, 0, 1, 1], [], []>} : vector<64x8xbf16>, vector<8x288xbf16>, vector<64x288xf32> -> vector<64x288xf32>
    %54 = arith.addf %48, %53 : vector<64x288xf32>
    %c0_48 = arith.constant 0 : index
    %c0_49 = arith.constant 0 : index
    %55 = vector.load %arg3[%c0_48, %c0_49] : memref<64x1xf32, #tpu.memory_space<vmem>>, vector<64x1xf32>
    %56 = vector.broadcast %55 : vector<64x1xf32> to vector<64x288xf32>
    %57 = arith.addf %54, %56 : vector<64x288xf32>
    %cst_50 = arith.constant 0.000000e+00 : f32
    %58 = vector.broadcast %cst_50 : f32 to vector<64x288xf32>
    %59 = arith.cmpf oge, %57, %58 : vector<64x288xf32>
    %cst_51 = arith.constant 2.000000e-01 : f32
    %60 = vector.broadcast %cst_51 : f32 to vector<64x288xf32>
    %61 = arith.mulf %57, %60 : vector<64x288xf32>
    %62 = arith.select %59, %57, %61 : vector<64x288xi1>, vector<64x288xf32>
    %63 = arith.truncf %62 : vector<64x288xf32> to vector<64x288xbf16>
    %c0_52 = arith.constant 0 : index
    %c0_53 = arith.constant 0 : index
    %c0_54 = arith.constant 0 : index
    %64 = vector.load %arg4[%c0_52, %c0_53, %c0_54] : memref<1x64x288xbf16, #tpu.memory_space<vmem>>, vector<1x64x288xbf16>
    %65 = vector.shape_cast %64 : vector<1x64x288xbf16> to vector<64x288xbf16>
    %66 = vector.shape_cast %63 : vector<64x288xbf16> to vector<1x64x288xbf16>
    tpu.vector_store %arg4[%c0_52, %c0_53, %c0_54], %66 {strides = array<i32>} : memref<1x64x288xbf16, #tpu.memory_space<vmem>>, vector<1x64x288xbf16>,
    return
  }
  func.func @transform_0(%arg0: i32) -> (i32, i32, i32) {
    %c0_i32 = arith.constant 0 : i32
    %c0_i32_0 = arith.constant 0 : i32
    %c0_i32_1 = arith.constant 0 : i32
    return %arg0, %c0_i32, %c0_i32_0 : i32, i32, i32
  }
  func.func @transform_1(%arg0: i32) -> (i32, i32, i32) {
    %c0_i32 = arith.constant 0 : i32
    %c0_i32_0 = arith.constant 0 : i32
    %c0_i32_1 = arith.constant 0 : i32
    %c0_i32_2 = arith.constant 0 : i32
    return %c0_i32, %c0_i32_0, %c0_i32_1 : i32, i32, i32
  }
  func.func @transform_2(%arg0: i32) -> (i32, i32) {
    %c0_i32 = arith.constant 0 : i32
    %c0_i32_0 = arith.constant 0 : i32
    %c0_i32_1 = arith.constant 0 : i32
    return %c0_i32, %c0_i32_0 : i32, i32
  }
  func.func @transform_3(%arg0: i32) -> (i32, i32, i32) {
    %c0_i32 = arith.constant 0 : i32
    %c0_i32_0 = arith.constant 0 : i32
    %c0_i32_1 = arith.constant 0 : i32
    return %arg0, %c0_i32, %c0_i32_0 : i32, i32, i32
  }
}

</mosaic_0001>

<llo_original>
// kernel: conv2d.1
$region0: #{conv2d.1}
  #allocation0 [shape = 'u32[]', space=smem, size = 0x4, offset = 0x4, fixed_abs, tag = 'smem constant byte address 0x4 - core index']
  #allocation1 [shape = 'u32[144,128]{1,0:T(1,128)}', space=vmem, size = 0x12000, scoped, tag = 'internal scratch']
  %s0 = inlined_call_operand.vmem [shape: bf16[2,8,326], index: 0, kind: input, shape index: {}]
  %s1 = inlined_call_operand.vmem [shape: bf16[9,64,8], index: 1, kind: input, shape index: {}]
  %s2 = inlined_call_operand.vmem [shape: f32[64,1], index: 2, kind: input, shape index: {}]
  %s3 = inlined_call_operand.vmem [shape: bf16[2,64,288], index: 3, kind: output, shape index: {}]
  %s4 = sld [smem:[#allocation0]]
  $region45: #{conv2d.1} parent=0
    _
  %s6 = ssub.s32 1, %s4
  %s7 = scalar_select 0, %s6, %s4
  loop: start=0, step=1, limit=4
  $region2: #{conv2d.1} parent=0 // loop_pre_header
    _
  $region3: #{conv2d.1} parent=0 // loop_header
    %s9 = sphi 0, %s13
    %p10 = scmp.ge.s32.totalorder %s9, 4
    %s19 = sphi 0, %s21
    %s22 = sphi 0, %s19
    %s23 = sphi 0, %s22
    %s39 = sphi 0, %s23
    %s43 = sphi 0, %s43
    %s45 = sphi 0, %s43
    %s46 = sphi 0, %s45
    %s60 = sphi 0, %s46
    %s64 = sphi 0, %s64
    %s66 = sphi 0, %s64
    %s67 = sphi 0, %s66
    %s81 = sphi 0, %s67
    %s87 = sphi 0, %s89
    %s90 = sphi 0, %s87
    %s91 = sphi 0, %s90
    %s107 = sphi 0, %s91
  $region4: #{conv2d.1} parent=0 // loop_header_branch
    %12 = sbr.rel (%p10) target = $region8
  $region5: #{conv2d.1} parent=0 // loop_body
    %s14 = ssub.s32 %s9, 1
    %s15 = ssub.s32 %s9, 2
    %s16 = sadd.s32 %s9, 1
    %s17 = ssub.s32 %s9, %s16
    %p18 = scmp.eq.s32.totalorder %s17, 0
    %s20 = sadd.s32 %s19, 1
    %s21 = scalar_select %p18, %s19, %s20
    %p24 = pneg %p18
    %p25 = scmp.eq.s32.totalorder %s9, 1
    %p26 = por %p24, %p25
    %p27 = scmp.ne.s32.totalorder %s19, %s22
    %p28 = scmp.eq.s32.totalorder %s9, 0
    %p29 = por %p27, %p28
    %p30 = scmp.ne.s32.totalorder %s19, %s22
    %p31 = scmp.eq.s32.totalorder %s14, 1
    %p32 = por %p30, %p31
    %p33 = scmp.ne.s32.totalorder %s22, %s23
    %p34 = scmp.eq.s32.totalorder %s14, 0
    %p35 = por %p33, %p34
    %p36 = scmp.ne.s32.totalorder %s22, %s23
    %p37 = scmp.eq.s32.totalorder %s15, 1
    %p38 = por %p36, %p37
    %p40 = scmp.ne.s32.totalorder %s23, %s39
    %p41 = scmp.eq.s32.totalorder %s15, 0
    %p42 = por %p40, %p41
    %s44 = sadd.s32 %s43, 1
    %p47 = scmp.eq.s32.totalorder %s9, 1
    %p48 = scmp.ne.s32.totalorder %s43, %s45
    %p49 = scmp.eq.s32.totalorder %s9, 0
    %p50 = por %p48, %p49
    %p51 = scmp.ne.s32.totalorder %s43, %s45
    %p52 = scmp.eq.s32.totalorder %s14, 1
    %p53 = por %p51, %p52
    %p54 = scmp.ne.s32.totalorder %s45, %s46
    %p55 = scmp.eq.s32.totalorder %s14, 0
    %p56 = por %p54, %p55
    %p57 = scmp.ne.s32.totalorder %s45, %s46
    %p58 = scmp.eq.s32.totalorder %s15, 1
    %p59 = por %p57, %p58
    %p61 = scmp.ne.s32.totalorder %s46, %s60
    %p62 = scmp.eq.s32.totalorder %s15, 0
    %p63 = por %p61, %p62
    %s65 = sadd.s32 %s64, 1
    %p68 = scmp.eq.s32.totalorder %s9, 1
    %p69 = scmp.ne.s32.totalorder %s64, %s66
    %p70 = scmp.eq.s32.totalorder %s9, 0
    %p71 = por %p69, %p70
    %p72 = scmp.ne.s32.totalorder %s64, %s66
    %p73 = scmp.eq.s32.totalorder %s14, 1
    %p74 = por %p72, %p73
    %p75 = scmp.ne.s32.totalorder %s66, %s67
    %p76 = scmp.eq.s32.totalorder %s14, 0
    %p77 = por %p75, %p76
    %p78 = scmp.ne.s32.totalorder %s66, %s67
    %p79 = scmp.eq.s32.totalorder %s15, 1
    %p80 = por %p78, %p79
    %p82 = scmp.ne.s32.totalorder %s67, %s81
    %p83 = scmp.eq.s32.totalorder %s15, 0
    %p84 = por %p82, %p83
    %s85 = ssub.s32 %s9, %s16
    %p86 = scmp.eq.s32.totalorder %s85, 0
    %s88 = sadd.s32 %s87, 1
    %s89 = scalar_select %p86, %s87, %s88
    %p92 = pneg %p86
    %p93 = scmp.eq.s32.totalorder %s9, 1
    %p94 = por %p92, %p93
    %p95 = scmp.ne.s32.totalorder %s87, %s90
    %p96 = scmp.eq.s32.totalorder %s9, 0
    %p97 = por %p95, %p96
    %p98 = scmp.ne.s32.totalorder %s87, %s90
    %p99 = scmp.eq.s32.totalorder %s14, 1
    %p100 = por %p98, %p99
    %p101 = scmp.ne.s32.totalorder %s90, %s91
    %p102 = scmp.eq.s32.totalorder %s14, 0
    %p103 = por %p101, %p102
    %p104 = scmp.ne.s32.totalorder %s90, %s91
    %p105 = scmp.eq.s32.totalorder %s15, 1
    %p106 = por %p104, %p105
    %p108 = scmp.ne.s32.totalorder %s91, %s107
    %p109 = scmp.eq.s32.totalorder %s15, 0
    %p110 = por %p108, %p109
    %p111 = scmp.le.s32.totalorder 1, %s9
    %p112 = scmp.lt.s32.totalorder %s9, 3
    %p113 = pnand %p111, %p112
    %p114 = pneg %p113
    // Predicated region
    $region9: #{conv2d.1} parent=5 // pred_check
      _
    $region10: #{conv2d.1} parent=5 // pred_check_branch
      %116 = sbr.rel (%p113) target = $region12
    $region11: #{conv2d.1} parent=5 // pred_region
      %s117 = ssub.s32 %s9, 1
      // Predicated region
      $region13: #{conv2d.1} parent=11 // pred_check
        %p118 = pneg %p56
      $region14: #{conv2d.1} parent=11 // pred_check_branch
        %120 = sbr.rel (%p118) target = $region16
      $region15: #{conv2d.1} parent=11 // pred_region
        _
      $region16: #{conv2d.1} parent=11 // pred_fallthru
        _
      // Predicated region
      $region17: #{conv2d.1} parent=11 // pred_check
        %p121 = pneg %p77
      $region18: #{conv2d.1} parent=11 // pred_check_branch
        %123 = sbr.rel (%p121) target = $region20
      $region19: #{conv2d.1} parent=11 // pred_region
        _
      $region20: #{conv2d.1} parent=11 // pred_fallthru
        _
    $region12: #{conv2d.1} parent=5 // pred_fallthru
      _
    %p124 = scmp.lt.s32.totalorder %s9, 2
    // Predicated region
    $region21: #{conv2d.1} parent=5 // pred_check
      %p125 = pneg %p124
    $region22: #{conv2d.1} parent=5 // pred_check_branch
      %127 = sbr.rel (%p125) target = $region24
    $region23: #{conv2d.1} parent=5 // pred_region
      // Predicated region
      $region25: #{conv2d.1} parent=23 // pred_check
        %p128 = pneg %p29
      $region26: #{conv2d.1} parent=23 // pred_check_branch
        %130 = sbr.rel (%p128) target = $region28
      $region27: #{conv2d.1} parent=23 // pred_region
        %p131 = scmp.lt.s32.totalorder %s9, 1
        %s132 = scalar_select %p131, %s9, 1
        %s133 = smul.addr %s132, 3
        %s134 = smul.addr %s133, 4
        %s135 = scalar_lea.vmem %s0, %s134
      $region28: #{conv2d.1} parent=23 // pred_fallthru
        _
    $region24: #{conv2d.1} parent=5 // pred_fallthru
      _
    %p136 = scmp.le.s32.totalorder 1, %s9
    %p137 = scmp.lt.s32.totalorder %s9, 3
    %p138 = pnand %p136, %p137
    %p139 = pneg %p138
    // Predicated region
    $region29: #{conv2d.1} parent=5 // pred_check
      _
    $region30: #{conv2d.1} parent=5 // pred_check_branch
      %141 = sbr.rel (%p138) target = $region32
    $region31: #{conv2d.1} parent=5 // pred_region
      %s142 = ssub.s32 %s9, 1
      %p143 = scmp.lt.s32.totalorder %s14, 1
      %s144 = scalar_select %p143, %s14, 1
      %s145 = smul.addr %s144, 3
      %s146 = smul.addr %s145, 4
      %s147 = scalar_lea.vmem %s0, %s146
      %p148 = pneg %p35
      %p149 = pneg %p32
      %p150 = pneg %p56
      %p151 = pneg %p53
      %p152 = pneg %p77
      %p153 = pneg %p74
      %p154 = pneg %p103
      %p155 = pneg %p100
      %p156 = scmp.lt.s32.totalorder %s14, 1
      %s157 = scalar_select %p156, %s14, 1
      %s158 = smul.addr %s157, 24
      %s159 = smul.addr %s158, 4
      %s160 = scalar_lea.vmem %s3, %s159
      %p161 = scmp.lt.s32.totalorder %s14, 1
      %s162 = scalar_select %p161, %s14, 1
      %s163 = smul.addr %s162, 3
      %s164 = smul.addr %s163, 4
      %s165 = scalar_lea.vmem %s0, %s164
      %p166 = scmp.lt.s32.totalorder %s14, 1
      %s167 = scalar_select %p166, %s14, 1
      %s168 = smul.addr %s167, 24
      %s169 = smul.addr %s168, 4
      %s170 = scalar_lea.vmem %s3, %s169
      %v172 = vld [vmem:[%s165] sm:$0xff]
      %v173 = vld [vmem:[%s165 + $0x8] sm:$0xf]
      %v174 = vld [vmem:[%s1] sm:$0xf]
      %v175 = vld [vmem:[%s1 + $0x4] sm:$0xf]
      %v176 = vld [vmem:[%s1 + $0x8] sm:$0xf]
      %v177 = vld [vmem:[%s1 + $0xc] sm:$0xf]
      %v178 = vld [vmem:[%s1 + $0x10] sm:$0xf]
      %v179 = vld [vmem:[%s1 + $0x14] sm:$0xf]
      %v180 = vld [vmem:[%s1 + $0x18] sm:$0xf]
      %v181 = vld [vmem:[%s1 + $0x1c] sm:$0xf]
      %s182 = scalar_lea.vmem %s1, 32
      %v183 = vld [vmem:[%s182] sm:$0xf]
      %v184 = vld [vmem:[%s182 + $0x4] sm:$0xf]
      %v185 = vld [vmem:[%s182 + $0x8] sm:$0xf]
      %v186 = vld [vmem:[%s182 + $0xc] sm:$0xf]
      %v187 = vld [vmem:[%s182 + $0x10] sm:$0xf]
      %v188 = vld [vmem:[%s182 + $0x14] sm:$0xf]
      %v189 = vld [vmem:[%s182 + $0x18] sm:$0xf]
      %v190 = vld [vmem:[%s182 + $0x1c] sm:$0xf]
      %v199 = vunpack.c.l.b16 %v183
      %v200 = vunpack.c.l.b16 %v184
      %v201 = vunpack.c.l.b16 %v185
      %v202 = vunpack.c.l.b16 %v186
      %v203 = vunpack.c.l.b16 %v187
      %v204 = vunpack.c.l.b16 %v188
      %v205 = vunpack.c.l.b16 %v189
      %v206 = vunpack.c.l.b16 %v190
      %v207 = vpack.c.b16 %v200, %v199
      %v208 = vpack.c.b16 %v202, %v201
      %v209 = vpack.c.b16 %v204, %v203
      %v210 = vpack.c.b16 %v206, %v205
      %v213 = vunpack.c.l.b16 %v172
      %v214 = vunpack.c.h.b16 %v172
      %v215 = vunpack.c.l.b16 %v173
      %v216 = vpack.c.b16 %v213, %v213
      %v217 = vpack.c.b16 %v214, %v214
      %v218 = vpack.c.b16 %v215, %v215
      %219 = vrot.lane.b32.xlu0 %v216, 127
      %v220 = vpop.permute.xlu0 %219
      %221 = vrot.lane.b32.xlu0 %v217, 127
      %v222 = vpop.permute.xlu0 %221
      %223 = vrot.lane.b32.xlu0 %v218, 127
      %v224 = vpop.permute.xlu0 %223
      %vm225 = vcmask 1039360
      %v226 = vsel %vm225, %v220, %v222
      %v227 = vsel %vm225, %v222, %v224
      %vm228 = vcmask 64512
      %v230 = vsel %vm228, %v207, 0
      %v233 = vsel %vm228, %v208, 0
      %v236 = vsel %vm228, %v209, 0
      %v239 = vsel %vm228, %v210, 0
      %vm241 = vcmask 1043456
      %v243 = vsel %vm241, %v226, 0
      %v246 = vsel %vm241, %v227, 0
      %v249 = vsel %vm241, %v224, 0
      %251 = vmatprep.subr.bf16.mxu0 %v246
      %252 = vmatpush1.bf16.msra.mxu0 %v243
      %253 = vmatprep.subr.bf16.mxu0 0
      %254 = vmatpush1.bf16.msra.mxu0 0
      %255 = vmatprep.subr.bf16.mxu0 0
      %256 = vmatpush1.bf16.msra.mxu0 0
      %257 = vmatprep.subr.bf16.mxu0 0
      %258 = vmatpush1.bf16.msra.mxu0 0
      %259 = vmatprep.subr.bf16.mxu0 0
      %260 = vmatpush1.bf16.msra.mxu0 0
      %261 = vmatprep.subr.bf16.mxu0 0
      %262 = vmatpush1.bf16.msra.mxu0 0
      %263 = vmatprep.subr.bf16.mxu0 0
      %264 = vmatpush1.bf16.msra.mxu0 0
      %265 = vmatprep.subr.bf16.mxu0 0
      %266 = vmatpush1.bf16.msra.mxu0 0
      %267 = vmatprep.subr.bf16.mxu0 0
      %268 = vmatpush1.bf16.msra.mxu0 0
      %269 = vmatprep.subr.bf16.mxu0 0
      %270 = vmatpush1.bf16.msra.mxu0 0
      %271 = vmatprep.subr.bf16.mxu0 0
      %272 = vmatpush1.bf16.msra.mxu0 0
      %273 = vmatprep.subr.bf16.mxu0 0
      %274 = vmatpush1.bf16.msra.mxu0 0
      %275 = vmatprep.subr.bf16.mxu0 0
      %276 = vmatpush1.bf16.msra.mxu0 0
      %277 = vmatprep.subr.bf16.mxu0 0
      %278 = vmatpush1.bf16.msra.mxu0 0
      %279 = vmatprep.subr.bf16.mxu0 0
      %280 = vmatpush1.bf16.msra.mxu0 0
      %281 = vmatprep.subr.bf16.mxu0 0
      %282 = vmatpush1.bf16.msra.mxu0 0
      %283 = vmatprep.mubr.bf16.mxu0 0
      %284 = vmatmul.mubr.bf16.gmra.mrb[0].mxu0 %v230
      %v285 = vpop.f32.mrb[0].mxu0
      %v286 = vadd.f32 0.0, %v285
      %v287 = vpop.f32.mrb[0].mxu0
      %v288 = vadd.f32 0.0, %v287
      %v289 = vpop.f32.mrb[0].mxu0
      %v290 = vadd.f32 0.0, %v289
      %v291 = vpop.f32.mrb[0].mxu0
      %v292 = vadd.f32 0.0, %v291
      %293 = vmatprep.mubr.bf16.mxu0 0
      %294 = vmatmul.mubr.bf16.gmra.mrb[0].mxu0 %v233
      %v295 = vpop.f32.mrb[0].mxu0
      %v296 = vadd.f32 0.0, %v295
      %v297 = vpop.f32.mrb[0].mxu0
      %v298 = vadd.f32 0.0, %v297
      %v299 = vpop.f32.mrb[0].mxu0
      %v300 = vadd.f32 0.0, %v299
      %v301 = vpop.f32.mrb[0].mxu0
      %v302 = vadd.f32 0.0, %v301
      %303 = vmatprep.mubr.bf16.mxu0 0
      %304 = vmatmul.mubr.bf16.gmra.mrb[0].mxu0 %v236
      %v305 = vpop.f32.mrb[0].mxu0
      %v306 = vadd.f32 0.0, %v305
      %v307 = vpop.f32.mrb[0].mxu0
      %v308 = vadd.f32 0.0, %v307
      %v309 = vpop.f32.mrb[0].mxu0
      %v310 = vadd.f32 0.0, %v309
      %v311 = vpop.f32.mrb[0].mxu0
      %v312 = vadd.f32 0.0, %v311
      %313 = vmatprep.mubr.bf16.mxu0 0
      %314 = vmatmul.mubr.bf16.gmra.mrb[0].mxu0 %v239
      %v315 = vpop.f32.mrb[0].mxu0
      %v316 = vadd.f32 0.0, %v315
      %v317 = vpop.f32.mrb[0].mxu0
      %v318 = vadd.f32 0.0, %v317
      %v319 = vpop.f32.mrb[0].mxu0
      %v320 = vadd.f32 0.0, %v319
      %v321 = vpop.f32.mrb[0].mxu0
      %v322 = vadd.f32 0.0, %v321
      %323 = vdwg.mxu0
      %324 = vmatprep.subr.bf16.mxu0 0
      %325 = vmatpush1.bf16.msra.mxu0 %v249
      %326 = vmatprep.subr.bf16.mxu0 0
      %327 = vmatpush1.bf16.msra.mxu0 0
      %328 = vmatprep.subr.bf16.mxu0 0
      %329 = vmatpush1.bf16.msra.mxu0 0
      %330 = vmatprep.subr.bf16.mxu0 0
      %331 = vmatpush1.bf16.msra.mxu0 0
      %332 = vmatprep.subr.bf16.mxu0 0
      %333 = vmatpush1.bf16.msra.mxu0 0
      %334 = vmatprep.subr.bf16.mxu0 0
      %335 = vmatpush1.bf16.msra.mxu0 0
      %336 = vmatprep.subr.bf16.mxu0 0
      %337 = vmatpush1.bf16.msra.mxu0 0
      %338 = vmatprep.subr.bf16.mxu0 0
      %339 = vmatpush1.bf16.msra.mxu0 0
      %340 = vmatprep.subr.bf16.mxu0 0
      %341 = vmatpush1.bf16.msra.mxu0 0
      %342 = vmatprep.subr.bf16.mxu0 0
      %343 = vmatpush1.bf16.msra.mxu0 0
      %344 = vmatprep.subr.bf16.mxu0 0
      %345 = vmatpush1.bf16.msra.mxu0 0
      %346 = vmatprep.subr.bf16.mxu0 0
      %347 = vmatpush1.bf16.msra.mxu0 0
      %348 = vmatprep.subr.bf16.mxu0 0
      %349 = vmatpush1.bf16.msra.mxu0 0
      %350 = vmatprep.subr.bf16.mxu0 0
      %351 = vmatpush1.bf16.msra.mxu0 0
      %352 = vmatprep.subr.bf16.mxu0 0
      %353 = vmatpush1.bf16.msra.mxu0 0
      %354 = vmatprep.subr.bf16.mxu0 0
      %355 = vmatpush1.bf16.msra.mxu0 0
      %356 = vmatprep.mubr.bf16.mxu0 0
      %357 = vmatmul.mubr.bf16.gmra.mrb[0].mxu0 %v230
      %v358 = vpop.f32.mrb[0].mxu0
      %v359 = vadd.f32 0.0, %v358
      %v360 = vpop.f32.mrb[0].mxu0
      %v361 = vpop.f32.mrb[0].mxu0
      %v362 = vadd.f32 0.0, %v361
      %v363 = vpop.f32.mrb[0].mxu0
      %364 = vmatprep.mubr.bf16.mxu0 0
      %365 = vmatmul.mubr.bf16.gmra.mrb[0].mxu0 %v233
      %v366 = vpop.f32.mrb[0].mxu0
      %v367 = vadd.f32 0.0, %v366
      %v368 = vpop.f32.mrb[0].mxu0
      %v369 = vpop.f32.mrb[0].mxu0
      %v370 = vadd.f32 0.0, %v369
      %v371 = vpop.f32.mrb[0].mxu0
      %372 = vmatprep.mubr.bf16.mxu0 0
      %373 = vmatmul.mubr.bf16.gmra.mrb[0].mxu0 %v236
      %v374 = vpop.f32.mrb[0].mxu0
      %v375 = vadd.f32 0.0, %v374
      %v376 = vpop.f32.mrb[0].mxu0
      %v377 = vpop.f32.mrb[0].mxu0
      %v378 = vadd.f32 0.0, %v377
      %v379 = vpop.f32.mrb[0].mxu0
      %380 = vmatprep.mubr.bf16.mxu0 0
      %381 = vmatmul.mubr.bf16.gmra.mrb[0].mxu0 %v239
      %v382 = vpop.f32.mrb[0].mxu0
      %v383 = vadd.f32 0.0, %v382
      %v384 = vpop.f32.mrb[0].mxu0
      %v385 = vpop.f32.mrb[0].mxu0
      %v386 = vadd.f32 0.0, %v385
      %v387 = vpop.f32.mrb[0].mxu0
      %388 = vdwg.mxu0
      %v397 = vunpack.c.l.b16 %v174
      %v398 = vunpack.c.l.b16 %v175
      %v399 = vunpack.c.l.b16 %v176
      %v400 = vunpack.c.l.b16 %v177
      %v401 = vunpack.c.l.b16 %v178
      %v402 = vunpack.c.l.b16 %v179
      %v403 = vunpack.c.l.b16 %v180
      %v404 = vunpack.c.l.b16 %v181
      %v405 = vpack.c.b16 %v398, %v397
      %v406 = vpack.c.b16 %v400, %v399
      %v407 = vpack.c.b16 %v402, %v401
      %v408 = vpack.c.b16 %v404, %v403
      %v410 = vsel %vm228, %v405, 0
      %v413 = vsel %vm228, %v406, 0
      %v416 = vsel %vm228, %v407, 0
      %v419 = vsel %vm228, %v408, 0
      %v422 = vsel %vm241, %v216, 0
      %v425 = vsel %vm241, %v217, 0
      %v428 = vsel %vm241, %v218, 0
      %430 = vmatprep.subr.bf16.mxu0 %v425
      %431 = vmatpush1.bf16.msra.mxu0 %v422
      %432 = vmatprep.subr.bf16.mxu0 0
      %433 = vmatpush1.bf16.msra.mxu0 0
      %434 = vmatprep.subr.bf16.mxu0 0
      %435 = vmatpush1.bf16.msra.mxu0 0
      %436 = vmatprep.subr.bf16.mxu0 0
      %437 = vmatpush1.bf16.msra.mxu0 0
      %438 = vmatprep.subr.bf16.mxu0 0
      %439 = vmatpush1.bf16.msra.mxu0 0
      %440 = vmatprep.subr.bf16.mxu0 0
      %441 = vmatpush1.bf16.msra.mxu0 0
      %442 = vmatprep.subr.bf16.mxu0 0
      %443 = vmatpush1.bf16.msra.mxu0 0
      %444 = vmatprep.subr.bf16.mxu0 0
      %445 = vmatpush1.bf16.msra.mxu0 0
      %446 = vmatprep.subr.bf16.mxu0 0
      %447 = vmatpush1.bf16.msra.mxu0 0
      %448 = vmatprep.subr.bf16.mxu0 0
      %449 = vmatpush1.bf16.msra.mxu0 0
      %450 = vmatprep.subr.bf16.mxu0 0
      %451 = vmatpush1.bf16.msra.mxu0 0
      %452 = vmatprep.subr.bf16.mxu0 0
      %453 = vmatpush1.bf16.msra.mxu0 0
      %454 = vmatprep.subr.bf16.mxu0 0
      %455 = vmatpush1.bf16.msra.mxu0 0
      %456 = vmatprep.subr.bf16.mxu0 0
      %457 = vmatpush1.bf16.msra.mxu0 0
      %458 = vmatprep.subr.bf16.mxu0 0
      %459 = vmatpush1.bf16.msra.mxu0 0
      %460 = vmatprep.subr.bf16.mxu0 0
      %461 = vmatpush1.bf16.msra.mxu0 0
      %462 = vmatprep.mubr.bf16.mxu0 0
      %463 = vmatmul.mubr.bf16.gmra.mrb[0].mxu0 %v410
      %v464 = vpop.f32.mrb[0].mxu0
      %v465 = vadd.f32 %v286, %v464
      %v466 = vpop.f32.mrb[0].mxu0
      %v467 = vadd.f32 %v288, %v466
      %v468 = vpop.f32.mrb[0].mxu0
      %v469 = vadd.f32 %v290, %v468
      %v470 = vpop.f32.mrb[0].mxu0
      %v471 = vadd.f32 %v292, %v470
      %472 = vmatprep.mubr.bf16.mxu0 0
      %473 = vmatmul.mubr.bf16.gmra.mrb[0].mxu0 %v413
      %v474 = vpop.f32.mrb[0].mxu0
      %v475 = vadd.f32 %v296, %v474
      %v476 = vpop.f32.mrb[0].mxu0
      %v477 = vadd.f32 %v298, %v476
      %v478 = vpop.f32.mrb[0].mxu0
      %v479 = vadd.f32 %v300, %v478
      %v480 = vpop.f32.mrb[0].mxu0
      %v481 = vadd.f32 %v302, %v480
      %482 = vmatprep.mubr.bf16.mxu0 0
      %483 = vmatmul.mubr.bf16.gmra.mrb[0].mxu0 %v416
      %v484 = vpop.f32.mrb[0].mxu0
      %v485 = vadd.f32 %v306, %v484
      %v486 = vpop.f32.mrb[0].mxu0
      %v487 = vadd.f32 %v308, %v486
      %v488 = vpop.f32.mrb[0].mxu0
      %v489 = vadd.f32 %v310, %v488
      %v490 = vpop.f32.mrb[0].mxu0
      %v491 = vadd.f32 %v312, %v490
      %492 = vmatprep.mubr.bf16.mxu0 0
      %493 = vmatmul.mubr.bf16.gmra.mrb[0].mxu0 %v419
      %v494 = vpop.f32.mrb[0].mxu0
      %v495 = vadd.f32 %v316, %v494
      %v496 = vpop.f32.mrb[0].mxu0
      %v497 = vadd.f32 %v318, %v496
      %v498 = vpop.f32.mrb[0].mxu0
      %v499 = vadd.f32 %v320, %v498
      %v500 = vpop.f32.mrb[0].mxu0
      %v501 = vadd.f32 %v322, %v500
      %502 = vdwg.mxu0
      %503 = vmatprep.subr.bf16.mxu0 0
      %504 = vmatpush1.bf16.msra.mxu0 %v428
      %505 = vmatprep.subr.bf16.mxu0 0
      %506 = vmatpush1.bf16.msra.mxu0 0
      %507 = vmatprep.subr.bf16.mxu0 0
      %508 = vmatpush1.bf16.msra.mxu0 0
      %509 = vmatprep.subr.bf16.mxu0 0
      %510 = vmatpush1.bf16.msra.mxu0 0
      %511 = vmatprep.subr.bf16.mxu0 0
      %512 = vmatpush1.bf16.msra.mxu0 0
      %513 = vmatprep.subr.bf16.mxu0 0
      %514 = vmatpush1.bf16.msra.mxu0 0
      %515 = vmatprep.subr.bf16.mxu0 0
      %516 = vmatpush1.bf16.msra.mxu0 0
      %517 = vmatprep.subr.bf16.mxu0 0
      %518 = vmatpush1.bf16.msra.mxu0 0
      %519 = vmatprep.subr.bf16.mxu0 0
      %520 = vmatpush1.bf16.msra.mxu0 0
      %521 = vmatprep.subr.bf16.mxu0 0
      %522 = vmatpush1.bf16.msra.mxu0 0
      %523 = vmatprep.subr.bf16.mxu0 0
      %524 = vmatpush1.bf16.msra.mxu0 0
      %525 = vmatprep.subr.bf16.mxu0 0
      %526 = vmatpush1.bf16.msra.mxu0 0
      %527 = vmatprep.subr.bf16.mxu0 0
      %528 = vmatpush1.bf16.msra.mxu0 0
      %529 = vmatprep.subr.bf16.mxu0 0
      %530 = vmatpush1.bf16.msra.mxu0 0
      %531 = vmatprep.subr.bf16.mxu0 0
      %532 = vmatpush1.bf16.msra.mxu0 0
      %533 = vmatprep.subr.bf16.mxu0 0
      %534 = vmatpush1.bf16.msra.mxu0 0
      %535 = vmatprep.mubr.bf16.mxu0 0
      %536 = vmatmul.mubr.bf16.gmra.mrb[0].mxu0 %v410
      %v537 = vpop.f32.mrb[0].mxu0
      %v538 = vadd.f32 %v359, %v537
      %v539 = vpop.f32.mrb[0].mxu0
      %v540 = vpop.f32.mrb[0].mxu0
      %v541 = vadd.f32 %v362, %v540
      %v542 = vpop.f32.mrb[0].mxu0
      %543 = vmatprep.mubr.bf16.mxu0 0
      %544 = vmatmul.mubr.bf16.gmra.mrb[0].mxu0 %v413
      %v545 = vpop.f32.mrb[0].mxu0
      %v546 = vadd.f32 %v367, %v545
      %v547 = vpop.f32.mrb[0].mxu0
      %v548 = vpop.f32.mrb[0].mxu0
      %v549 = vadd.f32 %v370, %v548
      %v550 = vpop.f32.mrb[0].mxu0
      %551 = vmatprep.mubr.bf16.mxu0 0
      %552 = vmatmul.mubr.bf16.gmra.mrb[0].mxu0 %v416
      %v553 = vpop.f32.mrb[0].mxu0
      %v554 = vadd.f32 %v375, %v553
      %v555 = vpop.f32.mrb[0].mxu0
      %v556 = vpop.f32.mrb[0].mxu0
      %v557 = vadd.f32 %v378, %v556
      %v558 = vpop.f32.mrb[0].mxu0
      %559 = vmatprep.mubr.bf16.mxu0 0
      %560 = vmatmul.mubr.bf16.gmra.mrb[0].mxu0 %v419
      %v561 = vpop.f32.mrb[0].mxu0
      %v562 = vadd.f32 %v383, %v561
      %v563 = vpop.f32.mrb[0].mxu0
      %v564 = vpop.f32.mrb[0].mxu0
      %v565 = vadd.f32 %v386, %v564
      %v566 = vpop.f32.mrb[0].mxu0
      %567 = vdwg.mxu0
      %s568 = scalar_lea.vmem %s1, 64
      %v569 = vld [vmem:[%s568] sm:$0xf]
      %v570 = vld [vmem:[%s568 + $0x4] sm:$0xf]
      %v571 = vld [vmem:[%s568 + $0x8] sm:$0xf]
      %v572 = vld [vmem:[%s568 + $0xc] sm:$0xf]
      %v573 = vld [vmem:[%s568 + $0x10] sm:$0xf]
      %v574 = vld [vmem:[%s568 + $0x14] sm:$0xf]
      %v575 = vld [vmem:[%s568 + $0x18] sm:$0xf]
      %v576 = vld [vmem:[%s568 + $0x1c] sm:$0xf]
      %v585 = vunpack.c.l.b16 %v569
      %v586 = vunpack.c.l.b16 %v570
      %v587 = vunpack.c.l.b16 %v571
      %v588 = vunpack.c.l.b16 %v572
      %v589 = vunpack.c.l.b16 %v573
      %v590 = vunpack.c.l.b16 %v574
      %v591 = vunpack.c.l.b16 %v575
      %v592 = vunpack.c.l.b16 %v576
      %v593 = vpack.c.b16 %v586, %v585
      %v594 = vpack.c.b16 %v588, %v587
      %v595 = vpack.c.b16 %v590, %v589
      %v596 = vpack.c.b16 %v592, %v591
      %597 = vrot.lane.b32.xlu0 %v216, 126
      %v598 = vpop.permute.xlu0 %597
      %599 = vrot.lane.b32.xlu0 %v217, 126
      %v600 = vpop.permute.xlu0 %599
      %601 = vrot.lane.b32.xlu0 %v218, 126
      %v602 = vpop.permute.xlu0 %601
      %vm603 = vcmask 1031168
      %v604 = vsel %vm603, %v598, %v600
      %v605 = vsel %vm603, %v600, %v602
      %v607 = vsel %vm228, %v593, 0
      %v610 = vsel %vm228, %v594, 0
      %v613 = vsel %vm228, %v595, 0
      %v616 = vsel %vm228, %v596, 0
      %v619 = vsel %vm241, %v604, 0
      %v622 = vsel %vm241, %v605, 0
      %v625 = vsel %vm241, %v602, 0
      %627 = vmatprep.subr.bf16.mxu0 %v622
      %628 = vmatpush1.bf16.msra.mxu0 %v619
      %629 = vmatprep.subr.bf16.mxu0 0
      %630 = vmatpush1.bf16.msra.mxu0 0
      %631 = vmatprep.subr.bf16.mxu0 0
      %632 = vmatpush1.bf16.msra.mxu0 0
      %633 = vmatprep.subr.bf16.mxu0 0
      %634 = vmatpush1.bf16.msra.mxu0 0
      %635 = vmatprep.subr.bf16.mxu0 0
      %636 = vmatpush1.bf16.msra.mxu0 0
      %637 = vmatprep.subr.bf16.mxu0 0
      %638 = vmatpush1.bf16.msra.mxu0 0
      %639 = vmatprep.subr.bf16.mxu0 0
      %640 = vmatpush1.bf16.msra.mxu0 0
      %641 = vmatprep.subr.bf16.mxu0 0
      %642 = vmatpush1.bf16.msra.mxu0 0
      %643 = vmatprep.subr.bf16.mxu0 0
      %644 = vmatpush1.bf16.msra.mxu0 0
      %645 = vmatprep.subr.bf16.mxu0 0
      %646 = vmatpush1.bf16.msra.mxu0 0
      %647 = vmatprep.subr.bf16.mxu0 0
      %648 = vmatpush1.bf16.msra.mxu0 0
      %649 = vmatprep.subr.bf16.mxu0 0
      %650 = vmatpush1.bf16.msra.mxu0 0
      %651 = vmatprep.subr.bf16.mxu0 0
      %652 = vmatpush1.bf16.msra.mxu0 0
      %653 = vmatprep.subr.bf16.mxu0 0
      %654 = vmatpush1.bf16.msra.mxu0 0
      %655 = vmatprep.subr.bf16.mxu0 0
      %656 = vmatpush1.bf16.msra.mxu0 0
      %657 = vmatprep.subr.bf16.mxu0 0
      %658 = vmatpush1.bf16.msra.mxu0 0
      %659 = vmatprep.mubr.bf16.mxu0 0
      %660 = vmatmul.mubr.bf16.gmra.mrb[0].mxu0 %v607
      %v661 = vpop.f32.mrb[0].mxu0
      %v662 = vadd.f32 0.0, %v661
      %v663 = vpop.f32.mrb[0].mxu0
      %v664 = vadd.f32 0.0, %v663
      %v665 = vpop.f32.mrb[0].mxu0
      %v666 = vadd.f32 0.0, %v665
      %v667 = vpop.f32.mrb[0].mxu0
      %v668 = vadd.f32 0.0, %v667
      %669 = vmatprep.mubr.bf16.mxu0 0
      %670 = vmatmul.mubr.bf16.gmra.mrb[0].mxu0 %v610
      %v671 = vpop.f32.mrb[0].mxu0
      %v672 = vadd.f32 0.0, %v671
      %v673 = vpop.f32.mrb[0].mxu0
      %v674 = vadd.f32 0.0, %v673
      %v675 = vpop.f32.mrb[0].mxu0
      %v676 = vadd.f32 0.0, %v675
      %v677 = vpop.f32.mrb[0].mxu0
      %v678 = vadd.f32 0.0, %v677
      %679 = vmatprep.mubr.bf16.mxu0 0
      %680 = vmatmul.mubr.bf16.gmra.mrb[0].mxu0 %v613
      %v681 = vpop.f32.mrb[0].mxu0
      %v682 = vadd.f32 0.0, %v681
      %v683 = vpop.f32.mrb[0].mxu0
      %v684 = vadd.f32 0.0, %v683
      %v685 = vpop.f32.mrb[0].mxu0
      %v686 = vadd.f32 0.0, %v685
      %v687 = vpop.f32.mrb[0].mxu0
      %v688 = vadd.f32 0.0, %v687
      %689 = vmatprep.mubr.bf16.mxu0 0
      %690 = vmatmul.mubr.bf16.gmra.mrb[0].mxu0 %v616
      %v691 = vpop.f32.mrb[0].mxu0
      %v692 = vadd.f32 0.0, %v691
      %v693 = vpop.f32.mrb[0].mxu0
      %v694 = vadd.f32 0.0, %v693
      %v695 = vpop.f32.mrb[0].mxu0
      %v696 = vadd.f32 0.0, %v695
      %v697 = vpop.f32.mrb[0].mxu0
      %v698 = vadd.f32 0.0, %v697
      %699 = vdwg.mxu0
      %700 = vmatprep.subr.bf16.mxu0 0
      %701 = vmatpush1.bf16.msra.mxu0 %v625
      %702 = vmatprep.subr.bf16.mxu0 0
      %703 = vmatpush1.bf16.msra.mxu0 0
      %704 = vmatprep.subr.bf16.mxu0 0
      %705 = vmatpush1.bf16.msra.mxu0 0
      %706 = vmatprep.subr.bf16.mxu0 0
      %707 = vmatpush1.bf16.msra.mxu0 0
      %708 = vmatprep.subr.bf16.mxu0 0
      %709 = vmatpush1.bf16.msra.mxu0 0
      %710 = vmatprep.subr.bf16.mxu0 0
      %711 = vmatpush1.bf16.msra.mxu0 0
      %712 = vmatprep.subr.bf16.mxu0 0
      %713 = vmatpush1.bf16.msra.mxu0 0
      %714 = vmatprep.subr.bf16.mxu0 0
      %715 = vmatpush1.bf16.msra.mxu0 0
      %716 = vmatprep.subr.bf16.mxu0 0
      %717 = vmatpush1.bf16.msra.mxu0 0
      %718 = vmatprep.subr.bf16.mxu0 0
      %719 = vmatpush1.bf16.msra.mxu0 0
      %720 = vmatprep.subr.bf16.mxu0 0
      %721 = vmatpush1.bf16.msra.mxu0 0
      %722 = vmatprep.subr.bf16.mxu0 0
      %723 = vmatpush1.bf16.msra.mxu0 0
      %724 = vmatprep.subr.bf16.mxu0 0
      %725 = vmatpush1.bf16.msra.mxu0 0
      %726 = vmatprep.subr.bf16.mxu0 0
      %727 = vmatpush1.bf16.msra.mxu0 0
      %728 = vmatprep.subr.bf16.mxu0 0
      %729 = vmatpush1.bf16.msra.mxu0 0
      %730 = vmatprep.subr.bf16.mxu0 0
      %731 = vmatpush1.bf16.msra.mxu0 0
      %732 = vmatprep.mubr.bf16.mxu0 0
      %733 = vmatmul.mubr.bf16.gmra.mrb[0].mxu0 %v607
      %v734 = vpop.f32.mrb[0].mxu0
      %v735 = vadd.f32 0.0, %v734
      %v736 = vpop.f32.mrb[0].mxu0
      %v737 = vpop.f32.mrb[0].mxu0
      %v738 = vadd.f32 0.0, %v737
      %v739 = vpop.f32.mrb[0].mxu0
      %740 = vmatprep.mubr.bf16.mxu0 0
      %741 = vmatmul.mubr.bf16.gmra.mrb[0].mxu0 %v610
      %v742 = vpop.f32.mrb[0].mxu0
      %v743 = vadd.f32 0.0, %v742
      %v744 = vpop.f32.mrb[0].mxu0
      %v745 = vpop.f32.mrb[0].mxu0
      %v746 = vadd.f32 0.0, %v745
      %v747 = vpop.f32.mrb[0].mxu0
      %748 = vmatprep.mubr.bf16.mxu0 0
      %749 = vmatmul.mubr.bf16.gmra.mrb[0].mxu0 %v613
      %v750 = vpop.f32.mrb[0].mxu0
      %v751 = vadd.f32 0.0, %v750
      %v752 = vpop.f32.mrb[0].mxu0
      %v753 = vpop.f32.mrb[0].mxu0
      %v754 = vadd.f32 0.0, %v753
      %v755 = vpop.f32.mrb[0].mxu0
      %756 = vmatprep.mubr.bf16.mxu0 0
      %757 = vmatmul.mubr.bf16.gmra.mrb[0].mxu0 %v616
      %v758 = vpop.f32.mrb[0].mxu0
      %v759 = vadd.f32 0.0, %v758
      %v760 = vpop.f32.mrb[0].mxu0
      %v761 = vpop.f32.mrb[0].mxu0
      %v762 = vadd.f32 0.0, %v761
      %v763 = vpop.f32.mrb[0].mxu0
      %764 = vdwg.mxu0
      %v765 = vadd.f32 %v465, %v662
      %v766 = vadd.f32 %v467, %v664
      %v767 = vadd.f32 %v538, %v735
      %v768 = vadd.f32 %v469, %v666
      %v769 = vadd.f32 %v471, %v668
      %v770 = vadd.f32 %v541, %v738
      %v771 = vadd.f32 %v475, %v672
      %v772 = vadd.f32 %v477, %v674
      %v773 = vadd.f32 %v546, %v743
      %v774 = vadd.f32 %v479, %v676
      %v775 = vadd.f32 %v481, %v678
      %v776 = vadd.f32 %v549, %v746
      %v777 = vadd.f32 %v485, %v682
      %v778 = vadd.f32 %v487, %v684
      %v779 = vadd.f32 %v554, %v751
      %v780 = vadd.f32 %v489, %v686
      %v781 = vadd.f32 %v491, %v688
      %v782 = vadd.f32 %v557, %v754
      %v783 = vadd.f32 %v495, %v692
      %v784 = vadd.f32 %v497, %v694
      %v785 = vadd.f32 %v562, %v759
      %v786 = vadd.f32 %v499, %v696
      %v787 = vadd.f32 %v501, %v698
      %v788 = vadd.f32 %v565, %v762
      %s789 = scalar_lea.vmem %s1, 96
      %v790 = vld [vmem:[%s789] sm:$0xf]
      %v791 = vld [vmem:[%s789 + $0x4] sm:$0xf]
      %v792 = vld [vmem:[%s789 + $0x8] sm:$0xf]
      %v793 = vld [vmem:[%s789 + $0xc] sm:$0xf]
      %v794 = vld [vmem:[%s789 + $0x10] sm:$0xf]
      %v795 = vld [vmem:[%s789 + $0x14] sm:$0xf]
      %v796 = vld [vmem:[%s789 + $0x18] sm:$0xf]
      %v797 = vld [vmem:[%s789 + $0x1c] sm:$0xf]
      %v806 = vunpack.c.l.b16 %v790
      %v807 = vunpack.c.l.b16 %v791
      %v808 = vunpack.c.l.b16 %v792
      %v809 = vunpack.c.l.b16 %v793
      %v810 = vunpack.c.l.b16 %v794
      %v811 = vunpack.c.l.b16 %v795
      %v812 = vunpack.c.l.b16 %v796
      %v813 = vunpack.c.l.b16 %v797
      %v814 = vpack.c.b16 %v807, %v806
      %v815 = vpack.c.b16 %v809, %v808
      %v816 = vpack.c.b16 %v811, %v810
      %v817 = vpack.c.b16 %v813, %v812
      %818 = vrot.lane.b32.xlu0 %v216, 110
      %v819 = vpop.permute.xlu0 %818
      %820 = vrot.lane.b32.xlu0 %v217, 110
      %v821 = vpop.permute.xlu0 %820
      %822 = vrot.lane.b32.xlu0 %v218, 110
      %v823 = vpop.permute.xlu0 %822
      %vm824 = vcmask 900096
      %v825 = vsel %vm824, %v819, %v821
      %v826 = vsel %vm824, %v821, %v823
      %v828 = vsel %vm228, %v814, 0
      %v831 = vsel %vm228, %v815, 0
      %v834 = vsel %vm228, %v816, 0
      %v837 = vsel %vm228, %v817, 0
      %v840 = vsel %vm241, %v825, 0
      %v843 = vsel %vm241, %v826, 0
      %v846 = vsel %vm241, %v823, 0
      %848 = vmatprep.subr.bf16.mxu0 %v843
      %849 = vmatpush1.bf16.msra.mxu0 %v840
      %850 = vmatprep.subr.bf16.mxu0 0
      %851 = vmatpush1.bf16.msra.mxu0 0
      %852 = vmatprep.subr.bf16.mxu0 0
      %853 = vmatpush1.bf16.msra.mxu0 0
      %854 = vmatprep.subr.bf16.mxu0 0
      %855 = vmatpush1.bf16.msra.mxu0 0
      %856 = vmatprep.subr.bf16.mxu0 0
      %857 = vmatpush1.bf16.msra.mxu0 0
      %858 = vmatprep.subr.bf16.mxu0 0
      %859 = vmatpush1.bf16.msra.mxu0 0
      %860 = vmatprep.subr.bf16.mxu0 0
      %861 = vmatpush1.bf16.msra.mxu0 0
      %862 = vmatprep.subr.bf16.mxu0 0
      %863 = vmatpush1.bf16.msra.mxu0 0
      %864 = vmatprep.subr.bf16.mxu0 0
      %865 = vmatpush1.bf16.msra.mxu0 0
      %866 = vmatprep.subr.bf16.mxu0 0
      %867 = vmatpush1.bf16.msra.mxu0 0
      %868 = vmatprep.subr.bf16.mxu0 0
      %869 = vmatpush1.bf16.msra.mxu0 0
      %870 = vmatprep.subr.bf16.mxu0 0
      %871 = vmatpush1.bf16.msra.mxu0 0
      %872 = vmatprep.subr.bf16.mxu0 0
      %873 = vmatpush1.bf16.msra.mxu0 0
      %874 = vmatprep.subr.bf16.mxu0 0
      %875 = vmatpush1.bf16.msra.mxu0 0
      %876 = vmatprep.subr.bf16.mxu0 0
      %877 = vmatpush1.bf16.msra.mxu0 0
      %878 = vmatprep.subr.bf16.mxu0 0
      %879 = vmatpush1.bf16.msra.mxu0 0
      %880 = vmatprep.mubr.bf16.mxu0 0
      %881 = vmatmul.mubr.bf16.gmra.mrb[0].mxu0 %v828
      %v882 = vpop.f32.mrb[0].mxu0
      %v883 = vadd.f32 0.0, %v882
      %v884 = vpop.f32.mrb[0].mxu0
      %v885 = vadd.f32 0.0, %v884
      %v886 = vpop.f32.mrb[0].mxu0
      %v887 = vadd.f32 0.0, %v886
      %v888 = vpop.f32.mrb[0].mxu0
      %v889 = vadd.f32 0.0, %v888
      %890 = vmatprep.mubr.bf16.mxu0 0
      %891 = vmatmul.mubr.bf16.gmra.mrb[0].mxu0 %v831
      %v892 = vpop.f32.mrb[0].mxu0
      %v893 = vadd.f32 0.0, %v892
      %v894 = vpop.f32.mrb[0].mxu0
      %v895 = vadd.f32 0.0, %v894
      %v896 = vpop.f32.mrb[0].mxu0
      %v897 = vadd.f32 0.0, %v896
      %v898 = vpop.f32.mrb[0].mxu0
      %v899 = vadd.f32 0.0, %v898
      %900 = vmatprep.mubr.bf16.mxu0 0
      %901 = vmatmul.mubr.bf16.gmra.mrb[0].mxu0 %v834
      %v902 = vpop.f32.mrb[0].mxu0
      %v903 = vadd.f32 0.0, %v902
      %v904 = vpop.f32.mrb[0].mxu0
      %v905 = vadd.f32 0.0, %v904
      %v906 = vpop.f32.mrb[0].mxu0
      %v907 = vadd.f32 0.0, %v906
      %v908 = vpop.f32.mrb[0].mxu0
      %v909 = vadd.f32 0.0, %v908
      %910 = vmatprep.mubr.bf16.mxu0 0
      %911 = vmatmul.mubr.bf16.gmra.mrb[0].mxu0 %v837
      %v912 = vpop.f32.mrb[0].mxu0
      %v913 = vadd.f32 0.0, %v912
      %v914 = vpop.f32.mrb[0].mxu0
      %v915 = vadd.f32 0.0, %v914
      %v916 = vpop.f32.mrb[0].mxu0
      %v917 = vadd.f32 0.0, %v916
      %v918 = vpop.f32.mrb[0].mxu0
      %v919 = vadd.f32 0.0, %v918
      %920 = vdwg.mxu0
      %921 = vmatprep.subr.bf16.mxu0 0
      %922 = vmatpush1.bf16.msra.mxu0 %v846
      %923 = vmatprep.subr.bf16.mxu0 0
      %924 = vmatpush1.bf16.msra.mxu0 0
      %925 = vmatprep.subr.bf16.mxu0 0
      %926 = vmatpush1.bf16.msra.mxu0 0
      %927 = vmatprep.subr.bf16.mxu0 0
      %928 = vmatpush1.bf16.msra.mxu0 0
      %929 = vmatprep.subr.bf16.mxu0 0
      %930 = vmatpush1.bf16.msra.mxu0 0
      %931 = vmatprep.subr.bf16.mxu0 0
      %932 = vmatpush1.bf16.msra.mxu0 0
      %933 = vmatprep.subr.bf16.mxu0 0
      %934 = vmatpush1.bf16.msra.mxu0 0
      %935 = vmatprep.subr.bf16.mxu0 0
      %936 = vmatpush1.bf16.msra.mxu0 0
      %937 = vmatprep.subr.bf16.mxu0 0
      %938 = vmatpush1.bf16.msra.mxu0 0
      %939 = vmatprep.subr.bf16.mxu0 0
      %940 = vmatpush1.bf16.msra.mxu0 0
      %941 = vmatprep.subr.bf16.mxu0 0
      %942 = vmatpush1.bf16.msra.mxu0 0
      %943 = vmatprep.subr.bf16.mxu0 0
      %944 = vmatpush1.bf16.msra.mxu0 0
      %945 = vmatprep.subr.bf16.mxu0 0
      %946 = vmatpush1.bf16.msra.mxu0 0
      %947 = vmatprep.subr.bf16.mxu0 0
      %948 = vmatpush1.bf16.msra.mxu0 0
      %949 = vmatprep.subr.bf16.mxu0 0
      %950 = vmatpush1.bf16.msra.mxu0 0
      %951 = vmatprep.subr.bf16.mxu0 0
      %952 = vmatpush1.bf16.msra.mxu0 0
      %953 = vmatprep.mubr.bf16.mxu0 0
      %954 = vmatmul.mubr.bf16.gmra.mrb[0].mxu0 %v828
      %v955 = vpop.f32.mrb[0].mxu0
      %v956 = vadd.f32 0.0, %v955
      %v957 = vpop.f32.mrb[0].mxu0
      %v958 = vpop.f32.mrb[0].mxu0
      %v959 = vadd.f32 0.0, %v958
      %v960 = vpop.f32.mrb[0].mxu0
      %961 = vmatprep.mubr.bf16.mxu0 0
      %962 = vmatmul.mubr.bf16.gmra.mrb[0].mxu0 %v831
      %v963 = vpop.f32.mrb[0].mxu0
      %v964 = vadd.f32 0.0, %v963
      %v965 = vpop.f32.mrb[0].mxu0
      %v966 = vpop.f32.mrb[0].mxu0
      %v967 = vadd.f32 0.0, %v966
      %v968 = vpop.f32.mrb[0].mxu0
      %969 = vmatprep.mubr.bf16.mxu0 0
      %970 = vmatmul.mubr.bf16.gmra.mrb[0].mxu0 %v834
      %v971 = vpop.f32.mrb[0].mxu0
      %v972 = vadd.f32 0.0, %v971
      %v973 = vpop.f32.mrb[0].mxu0
      %v974 = vpop.f32.mrb[0].mxu0
      %v975 = vadd.f32 0.0, %v974
      %v976 = vpop.f32.mrb[0].mxu0
      %977 = vmatprep.mubr.bf16.mxu0 0
      %978 = vmatmul.mubr.bf16.gmra.mrb[0].mxu0 %v837
      %v979 = vpop.f32.mrb[0].mxu0
      %v980 = vadd.f32 0.0, %v979
      %v981 = vpop.f32.mrb[0].mxu0
      %v982 = vpop.f32.mrb[0].mxu0
      %v983 = vadd.f32 0.0, %v982
      %v984 = vpop.f32.mrb[0].mxu0
      %985 = vdwg.mxu0
      %v986 = vadd.f32 %v765, %v883
      %v987 = vadd.f32 %v766, %v885
      %v988 = vadd.f32 %v767, %v956
      %v989 = vadd.f32 %v768, %v887
      %v990 = vadd.f32 %v769, %v889
      %v991 = vadd.f32 %v770, %v959
      %v992 = vadd.f32 %v771, %v893
      %v993 = vadd.f32 %v772, %v895
      %v994 = vadd.f32 %v773, %v964
      %v995 = vadd.f32 %v774, %v897
      %v996 = vadd.f32 %v775, %v899
      %v997 = vadd.f32 %v776, %v967
      %v998 = vadd.f32 %v777, %v903
      %v999 = vadd.f32 %v778, %v905
      %v1000 = vadd.f32 %v779, %v972
      %v1001 = vadd.f32 %v780, %v907
      %v1002 = vadd.f32 %v781, %v909
      %v1003 = vadd.f32 %v782, %v975
      %v1004 = vadd.f32 %v783, %v913
      %v1005 = vadd.f32 %v784, %v915
      %v1006 = vadd.f32 %v785, %v980
      %v1007 = vadd.f32 %v786, %v917
      %v1008 = vadd.f32 %v787, %v919
      %v1009 = vadd.f32 %v788, %v983
      %s1010 = scalar_lea.vmem %s1, 128
      %v1011 = vld [vmem:[%s1010] sm:$0xf]
      %v1012 = vld [vmem:[%s1010 + $0x4] sm:$0xf]
      %v1013 = vld [vmem:[%s1010 + $0x8] sm:$0xf]
      %v1014 = vld [vmem:[%s1010 + $0xc] sm:$0xf]
      %v1015 = vld [vmem:[%s1010 + $0x10] sm:$0xf]
      %v1016 = vld [vmem:[%s1010 + $0x14] sm:$0xf]
      %v1017 = vld [vmem:[%s1010 + $0x18] sm:$0xf]
      %v1018 = vld [vmem:[%s1010 + $0x1c] sm:$0xf]
      %v1027 = vunpack.c.l.b16 %v1011
      %v1028 = vunpack.c.l.b16 %v1012
      %v1029 = vunpack.c.l.b16 %v1013
      %v1030 = vunpack.c.l.b16 %v1014
      %v1031 = vunpack.c.l.b16 %v1015
      %v1032 = vunpack.c.l.b16 %v1016
      %v1033 = vunpack.c.l.b16 %v1017
      %v1034 = vunpack.c.l.b16 %v1018
      %v1035 = vpack.c.b16 %v1028, %v1027
      %v1036 = vpack.c.b16 %v1030, %v1029
      %v1037 = vpack.c.b16 %v1032, %v1031
      %v1038 = vpack.c.b16 %v1034, %v1033
      %1039 = vrot.lane.b32.xlu0 %v216, 109
      %v1040 = vpop.permute.xlu0 %1039
      %1041 = vrot.lane.b32.xlu0 %v217, 109
      %v1042 = vpop.permute.xlu0 %1041
      %1043 = vrot.lane.b32.xlu0 %v218, 109
      %v1044 = vpop.permute.xlu0 %1043
      %vm1045 = vcmask 891904
      %v1046 = vsel %vm1045, %v1040, %v1042
      %v1047 = vsel %vm1045, %v1042, %v1044
      %v1049 = vsel %vm228, %v1035, 0
      %v1052 = vsel %vm228, %v1036, 0
      %v1055 = vsel %vm228, %v1037, 0
      %v1058 = vsel %vm228, %v1038, 0
      %v1061 = vsel %vm241, %v1046, 0
      %v1064 = vsel %vm241, %v1047, 0
      %v1067 = vsel %vm241, %v1044, 0
      %1069 = vmatprep.subr.bf16.mxu0 %v1064
      %1070 = vmatpush1.bf16.msra.mxu0 %v1061
      %1071 = vmatprep.subr.bf16.mxu0 0
      %1072 = vmatpush1.bf16.msra.mxu0 0
      %1073 = vmatprep.subr.bf16.mxu0 0
      %1074 = vmatpush1.bf16.msra.mxu0 0
      %1075 = vmatprep.subr.bf16.mxu0 0
      %1076 = vmatpush1.bf16.msra.mxu0 0
      %1077 = vmatprep.subr.bf16.mxu0 0
      %1078 = vmatpush1.bf16.msra.mxu0 0
      %1079 = vmatprep.subr.bf16.mxu0 0
      %1080 = vmatpush1.bf16.msra.mxu0 0
      %1081 = vmatprep.subr.bf16.mxu0 0
      %1082 = vmatpush1.bf16.msra.mxu0 0
      %1083 = vmatprep.subr.bf16.mxu0 0
      %1084 = vmatpush1.bf16.msra.mxu0 0
      %1085 = vmatprep.subr.bf16.mxu0 0
      %1086 = vmatpush1.bf16.msra.mxu0 0
      %1087 = vmatprep.subr.bf16.mxu0 0
      %1088 = vmatpush1.bf16.msra.mxu0 0
      %1089 = vmatprep.subr.bf16.mxu0 0
      %1090 = vmatpush1.bf16.msra.mxu0 0
      %1091 = vmatprep.subr.bf16.mxu0 0
      %1092 = vmatpush1.bf16.msra.mxu0 0
      %1093 = vmatprep.subr.bf16.mxu0 0
      %1094 = vmatpush1.bf16.msra.mxu0 0
      %1095 = vmatprep.subr.bf16.mxu0 0
      %1096 = vmatpush1.bf16.msra.mxu0 0
      %1097 = vmatprep.subr.bf16.mxu0 0
      %1098 = vmatpush1.bf16.msra.mxu0 0
      %1099 = vmatprep.subr.bf16.mxu0 0
      %1100 = vmatpush1.bf16.msra.mxu0 0
      %1101 = vmatprep.mubr.bf16.mxu0 0
      %1102 = vmatmul.mubr.bf16.gmra.mrb[0].mxu0 %v1049
      %v1103 = vpop.f32.mrb[0].mxu0
      %v1104 = vadd.f32 0.0, %v1103
      %v1105 = vpop.f32.mrb[0].mxu0
      %v1106 = vadd.f32 0.0, %v1105
      %v1107 = vpop.f32.mrb[0].mxu0
      %v1108 = vadd.f32 0.0, %v1107
      %v1109 = vpop.f32.mrb[0].mxu0
      %v1110 = vadd.f32 0.0, %v1109
      %1111 = vmatprep.mubr.bf16.mxu0 0
      %1112 = vmatmul.mubr.bf16.gmra.mrb[0].mxu0 %v1052
      %v1113 = vpop.f32.mrb[0].mxu0
      %v1114 = vadd.f32 0.0, %v1113
      %v1115 = vpop.f32.mrb[0].mxu0
      %v1116 = vadd.f32 0.0, %v1115
      %v1117 = vpop.f32.mrb[0].mxu0
      %v1118 = vadd.f32 0.0, %v1117
      %v1119 = vpop.f32.mrb[0].mxu0
      %v1120 = vadd.f32 0.0, %v1119
      %1121 = vmatprep.mubr.bf16.mxu0 0
      %1122 = vmatmul.mubr.bf16.gmra.mrb[0].mxu0 %v1055
      %v1123 = vpop.f32.mrb[0].mxu0
      %v1124 = vadd.f32 0.0, %v1123
      %v1125 = vpop.f32.mrb[0].mxu0
      %v1126 = vadd.f32 0.0, %v1125
      %v1127 = vpop.f32.mrb[0].mxu0
      %v1128 = vadd.f32 0.0, %v1127
      %v1129 = vpop.f32.mrb[0].mxu0
      %v1130 = vadd.f32 0.0, %v1129
      %1131 = vmatprep.mubr.bf16.mxu0 0
      %1132 = vmatmul.mubr.bf16.gmra.mrb[0].mxu0 %v1058
      %v1133 = vpop.f32.mrb[0].mxu0
      %v1134 = vadd.f32 0.0, %v1133
      %v1135 = vpop.f32.mrb[0].mxu0
      %v1136 = vadd.f32 0.0, %v1135
      %v1137 = vpop.f32.mrb[0].mxu0
      %v1138 = vadd.f32 0.0, %v1137
      %v1139 = vpop.f32.mrb[0].mxu0
      %v1140 = vadd.f32 0.0, %v1139
      %1141 = vdwg.mxu0
      %1142 = vmatprep.subr.bf16.mxu0 0
      %1143 = vmatpush1.bf16.msra.mxu0 %v1067
      %1144 = vmatprep.subr.bf16.mxu0 0
      %1145 = vmatpush1.bf16.msra.mxu0 0
      %1146 = vmatprep.subr.bf16.mxu0 0
      %1147 = vmatpush1.bf16.msra.mxu0 0
      %1148 = vmatprep.subr.bf16.mxu0 0
      %1149 = vmatpush1.bf16.msra.mxu0 0
      %1150 = vmatprep.subr.bf16.mxu0 0
      %1151 = vmatpush1.bf16.msra.mxu0 0
      %1152 = vmatprep.subr.bf16.mxu0 0
      %1153 = vmatpush1.bf16.msra.mxu0 0
      %1154 = vmatprep.subr.bf16.mxu0 0
      %1155 = vmatpush1.bf16.msra.mxu0 0
      %1156 = vmatprep.subr.bf16.mxu0 0
      %1157 = vmatpush1.bf16.msra.mxu0 0
      %1158 = vmatprep.subr.bf16.mxu0 0
      %1159 = vmatpush1.bf16.msra.mxu0 0
      %1160 = vmatprep.subr.bf16.mxu0 0
      %1161 = vmatpush1.bf16.msra.mxu0 0
      %1162 = vmatprep.subr.bf16.mxu0 0
      %1163 = vmatpush1.bf16.msra.mxu0 0
      %1164 = vmatprep.subr.bf16.mxu0 0
      %1165 = vmatpush1.bf16.msra.mxu0 0
      %1166 = vmatprep.subr.bf16.mxu0 0
      %1167 = vmatpush1.bf16.msra.mxu0 0
      %1168 = vmatprep.subr.bf16.mxu0 0
      %1169 = vmatpush1.bf16.msra.mxu0 0
      %1170 = vmatprep.subr.bf16.mxu0 0
      %1171 = vmatpush1.bf16.msra.mxu0 0
      %1172 = vmatprep.subr.bf16.mxu0 0
      %1173 = vmatpush1.bf16.msra.mxu0 0
      %1174 = vmatprep.mubr.bf16.mxu0 0
      %1175 = vmatmul.mubr.bf16.gmra.mrb[0].mxu0 %v1049
      %v1176 = vpop.f32.mrb[0].mxu0
      %v1177 = vadd.f32 0.0, %v1176
      %v1178 = vpop.f32.mrb[0].mxu0
      %v1179 = vpop.f32.mrb[0].mxu0
      %v1180 = vadd.f32 0.0, %v1179
      %v1181 = vpop.f32.mrb[0].mxu0
      %1182 = vmatprep.mubr.bf16.mxu0 0
      %1183 = vmatmul.mubr.bf16.gmra.mrb[0].mxu0 %v1052
      %v1184 = vpop.f32.mrb[0].mxu0
      %v1185 = vadd.f32 0.0, %v1184
      %v1186 = vpop.f32.mrb[0].mxu0
      %v1187 = vpop.f32.mrb[0].mxu0
      %v1188 = vadd.f32 0.0, %v1187
      %v1189 = vpop.f32.mrb[0].mxu0
      %1190 = vmatprep.mubr.bf16.mxu0 0
      %1191 = vmatmul.mubr.bf16.gmra.mrb[0].mxu0 %v1055
      %v1192 = vpop.f32.mrb[0].mxu0
      %v1193 = vadd.f32 0.0, %v1192
      %v1194 = vpop.f32.mrb[0].mxu0
      %v1195 = vpop.f32.mrb[0].mxu0
      %v1196 = vadd.f32 0.0, %v1195
      %v1197 = vpop.f32.mrb[0].mxu0
      %1198 = vmatprep.mubr.bf16.mxu0 0
      %1199 = vmatmul.mubr.bf16.gmra.mrb[0].mxu0 %v1058
      %v1200 = vpop.f32.mrb[0].mxu0
      %v1201 = vadd.f32 0.0, %v1200
      %v1202 = vpop.f32.mrb[0].mxu0
      %v1203 = vpop.f32.mrb[0].mxu0
      %v1204 = vadd.f32 0.0, %v1203
      %v1205 = vpop.f32.mrb[0].mxu0
      %1206 = vdwg.mxu0
      %v1207 = vadd.f32 %v986, %v1104
      %v1208 = vadd.f32 %v987, %v1106
      %v1209 = vadd.f32 %v988, %v1177
      %v1210 = vadd.f32 %v989, %v1108
      %v1211 = vadd.f32 %v990, %v1110
      %v1212 = vadd.f32 %v991, %v1180
      %v1213 = vadd.f32 %v992, %v1114
      %v1214 = vadd.f32 %v993, %v1116
      %v1215 = vadd.f32 %v994, %v1185
      %v1216 = vadd.f32 %v995, %v1118
      %v1217 = vadd.f32 %v996, %v1120
      %v1218 = vadd.f32 %v997, %v1188
      %v1219 = vadd.f32 %v998, %v1124
      %v1220 = vadd.f32 %v999, %v1126
      %v1221 = vadd.f32 %v1000, %v1193
      %v1222 = vadd.f32 %v1001, %v1128
      %v1223 = vadd.f32 %v1002, %v1130
      %v1224 = vadd.f32 %v1003, %v1196
      %v1225 = vadd.f32 %v1004, %v1134
      %v1226 = vadd.f32 %v1005, %v1136
      %v1227 = vadd.f32 %v1006, %v1201
      %v1228 = vadd.f32 %v1007, %v1138
      %v1229 = vadd.f32 %v1008, %v1140
      %v1230 = vadd.f32 %v1009, %v1204
      %s1231 = scalar_lea.vmem %s1, 160
      %v1232 = vld [vmem:[%s1231] sm:$0xf]
      %v1233 = vld [vmem:[%s1231 + $0x4] sm:$0xf]
      %v1234 = vld [vmem:[%s1231 + $0x8] sm:$0xf]
      %v1235 = vld [vmem:[%s1231 + $0xc] sm:$0xf]
      %v1236 = vld [vmem:[%s1231 + $0x10] sm:$0xf]
      %v1237 = vld [vmem:[%s1231 + $0x14] sm:$0xf]
      %v1238 = vld [vmem:[%s1231 + $0x18] sm:$0xf]
      %v1239 = vld [vmem:[%s1231 + $0x1c] sm:$0xf]
      %v1248 = vunpack.c.l.b16 %v1232
      %v1249 = vunpack.c.l.b16 %v1233
      %v1250 = vunpack.c.l.b16 %v1234
      %v1251 = vunpack.c.l.b16 %v1235
      %v1252 = vunpack.c.l.b16 %v1236
      %v1253 = vunpack.c.l.b16 %v1237
      %v1254 = vunpack.c.l.b16 %v1238
      %v1255 = vunpack.c.l.b16 %v1239
      %v1256 = vpack.c.b16 %v1249, %v1248
      %v1257 = vpack.c.b16 %v1251, %v1250
      %v1258 = vpack.c.b16 %v1253, %v1252
      %v1259 = vpack.c.b16 %v1255, %v1254
      %1260 = vrot.lane.b32.xlu0 %v216, 108
      %v1261 = vpop.permute.xlu0 %1260
      %1262 = vrot.lane.b32.xlu0 %v217, 108
      %v1263 = vpop.permute.xlu0 %1262
      %1264 = vrot.lane.b32.xlu0 %v218, 108
      %v1265 = vpop.permute.xlu0 %1264
      %vm1266 = vcmask 883712
      %v1267 = vsel %vm1266, %v1261, %v1263
      %v1268 = vsel %vm1266, %v1263, %v1265
      %v1270 = vsel %vm228, %v1256, 0
      %v1273 = vsel %vm228, %v1257, 0
      %v1276 = vsel %vm228, %v1258, 0
      %v1279 = vsel %vm228, %v1259, 0
      %v1282 = vsel %vm241, %v1267, 0
      %v1285 = vsel %vm241, %v1268, 0
      %v1288 = vsel %vm241, %v1265, 0
      %1290 = vmatprep.subr.bf16.mxu0 %v1285
      %1291 = vmatpush1.bf16.msra.mxu0 %v1282
      %1292 = vmatprep.subr.bf16.mxu0 0
      %1293 = vmatpush1.bf16.msra.mxu0 0
      %1294 = vmatprep.subr.bf16.mxu0 0
      %1295 = vmatpush1.bf16.msra.mxu0 0
      %1296 = vmatprep.subr.bf16.mxu0 0
      %1297 = vmatpush1.bf16.msra.mxu0 0
      %1298 = vmatprep.subr.bf16.mxu0 0
      %1299 = vmatpush1.bf16.msra.mxu0 0
      %1300 = vmatprep.subr.bf16.mxu0 0
      %1301 = vmatpush1.bf16.msra.mxu0 0
      %1302 = vmatprep.subr.bf16.mxu0 0
      %1303 = vmatpush1.bf16.msra.mxu0 0
      %1304 = vmatprep.subr.bf16.mxu0 0
      %1305 = vmatpush1.bf16.msra.mxu0 0
      %1306 = vmatprep.subr.bf16.mxu0 0
      %1307 = vmatpush1.bf16.msra.mxu0 0
      %1308 = vmatprep.subr.bf16.mxu0 0
      %1309 = vmatpush1.bf16.msra.mxu0 0
      %1310 = vmatprep.subr.bf16.mxu0 0
      %1311 = vmatpush1.bf16.msra.mxu0 0
      %1312 = vmatprep.subr.bf16.mxu0 0
      %1313 = vmatpush1.bf16.msra.mxu0 0
      %1314 = vmatprep.subr.bf16.mxu0 0
      %1315 = vmatpush1.bf16.msra.mxu0 0
      %1316 = vmatprep.subr.bf16.mxu0 0
      %1317 = vmatpush1.bf16.msra.mxu0 0
      %1318 = vmatprep.subr.bf16.mxu0 0
      %1319 = vmatpush1.bf16.msra.mxu0 0
      %1320 = vmatprep.subr.bf16.mxu0 0
      %1321 = vmatpush1.bf16.msra.mxu0 0
      %1322 = vmatprep.mubr.bf16.mxu0 0
      %1323 = vmatmul.mubr.bf16.gmra.mrb[0].mxu0 %v1270
      %v1324 = vpop.f32.mrb[0].mxu0
      %v1325 = vadd.f32 0.0, %v1324
      %v1326 = vpop.f32.mrb[0].mxu0
      %v1327 = vadd.f32 0.0, %v1326
      %v1328 = vpop.f32.mrb[0].mxu0
      %v1329 = vadd.f32 0.0, %v1328
      %v1330 = vpop.f32.mrb[0].mxu0
      %v1331 = vadd.f32 0.0, %v1330
      %1332 = vmatprep.mubr.bf16.mxu0 0
      %1333 = vmatmul.mubr.bf16.gmra.mrb[0].mxu0 %v1273
      %v1334 = vpop.f32.mrb[0].mxu0
      %v1335 = vadd.f32 0.0, %v1334
      %v1336 = vpop.f32.mrb[0].mxu0
      %v1337 = vadd.f32 0.0, %v1336
      %v1338 = vpop.f32.mrb[0].mxu0
      %v1339 = vadd.f32 0.0, %v1338
      %v1340 = vpop.f32.mrb[0].mxu0
      %v1341 = vadd.f32 0.0, %v1340
      %1342 = vmatprep.mubr.bf16.mxu0 0
      %1343 = vmatmul.mubr.bf16.gmra.mrb[0].mxu0 %v1276
      %v1344 = vpop.f32.mrb[0].mxu0
      %v1345 = vadd.f32 0.0, %v1344
      %v1346 = vpop.f32.mrb[0].mxu0
      %v1347 = vadd.f32 0.0, %v1346
      %v1348 = vpop.f32.mrb[0].mxu0
      %v1349 = vadd.f32 0.0, %v1348
      %v1350 = vpop.f32.mrb[0].mxu0
      %v1351 = vadd.f32 0.0, %v1350
      %1352 = vmatprep.mubr.bf16.mxu0 0
      %1353 = vmatmul.mubr.bf16.gmra.mrb[0].mxu0 %v1279
      %v1354 = vpop.f32.mrb[0].mxu0
      %v1355 = vadd.f32 0.0, %v1354
      %v1356 = vpop.f32.mrb[0].mxu0
      %v1357 = vadd.f32 0.0, %v1356
      %v1358 = vpop.f32.mrb[0].mxu0
      %v1359 = vadd.f32 0.0, %v1358
      %v1360 = vpop.f32.mrb[0].mxu0
      %v1361 = vadd.f32 0.0, %v1360
      %1362 = vdwg.mxu0
      %1363 = vmatprep.subr.bf16.mxu0 0
      %1364 = vmatpush1.bf16.msra.mxu0 %v1288
      %1365 = vmatprep.subr.bf16.mxu0 0
      %1366 = vmatpush1.bf16.msra.mxu0 0
      %1367 = vmatprep.subr.bf16.mxu0 0
      %1368 = vmatpush1.bf16.msra.mxu0 0
      %1369 = vmatprep.subr.bf16.mxu0 0
      %1370 = vmatpush1.bf16.msra.mxu0 0
      %1371 = vmatprep.subr.bf16.mxu0 0
      %1372 = vmatpush1.bf16.msra.mxu0 0
      %1373 = vmatprep.subr.bf16.mxu0 0
      %1374 = vmatpush1.bf16.msra.mxu0 0
      %1375 = vmatprep.subr.bf16.mxu0 0
      %1376 = vmatpush1.bf16.msra.mxu0 0
      %1377 = vmatprep.subr.bf16.mxu0 0
      %1378 = vmatpush1.bf16.msra.mxu0 0
      %1379 = vmatprep.subr.bf16.mxu0 0
      %1380 = vmatpush1.bf16.msra.mxu0 0
      %1381 = vmatprep.subr.bf16.mxu0 0
      %1382 = vmatpush1.bf16.msra.mxu0 0
      %1383 = vmatprep.subr.bf16.mxu0 0
      %1384 = vmatpush1.bf16.msra.mxu0 0
      %1385 = vmatprep.subr.bf16.mxu0 0
      %1386 = vmatpush1.bf16.msra.mxu0 0
      %1387 = vmatprep.subr.bf16.mxu0 0
      %1388 = vmatpush1.bf16.msra.mxu0 0
      %1389 = vmatprep.subr.bf16.mxu0 0
      %1390 = vmatpush1.bf16.msra.mxu0 0
      %1391 = vmatprep.subr.bf16.mxu0 0
      %1392 = vmatpush1.bf16.msra.mxu0 0
      %1393 = vmatprep.subr.bf16.mxu0 0
      %1394 = vmatpush1.bf16.msra.mxu0 0
      %1395 = vmatprep.mubr.bf16.mxu0 0
      %1396 = vmatmul.mubr.bf16.gmra.mrb[0].mxu0 %v1270
      %v1397 = vpop.f32.mrb[0].mxu0
      %v1398 = vadd.f32 0.0, %v1397
      %v1399 = vpop.f32.mrb[0].mxu0
      %v1400 = vpop.f32.mrb[0].mxu0
      %v1401 = vadd.f32 0.0, %v1400
      %v1402 = vpop.f32.mrb[0].mxu0
      %1403 = vmatprep.mubr.bf16.mxu0 0
      %1404 = vmatmul.mubr.bf16.gmra.mrb[0].mxu0 %v1273
      %v1405 = vpop.f32.mrb[0].mxu0
      %v1406 = vadd.f32 0.0, %v1405
      %v1407 = vpop.f32.mrb[0].mxu0
      %v1408 = vpop.f32.mrb[0].mxu0
      %v1409 = vadd.f32 0.0, %v1408
      %v1410 = vpop.f32.mrb[0].mxu0
      %1411 = vmatprep.mubr.bf16.mxu0 0
      %1412 = vmatmul.mubr.bf16.gmra.mrb[0].mxu0 %v1276
      %v1413 = vpop.f32.mrb[0].mxu0
      %v1414 = vadd.f32 0.0, %v1413
      %v1415 = vpop.f32.mrb[0].mxu0
      %v1416 = vpop.f32.mrb[0].mxu0
      %v1417 = vadd.f32 0.0, %v1416
      %v1418 = vpop.f32.mrb[0].mxu0
      %1419 = vmatprep.mubr.bf16.mxu0 0
      %1420 = vmatmul.mubr.bf16.gmra.mrb[0].mxu0 %v1279
      %v1421 = vpop.f32.mrb[0].mxu0
      %v1422 = vadd.f32 0.0, %v1421
      %v1423 = vpop.f32.mrb[0].mxu0
      %v1424 = vpop.f32.mrb[0].mxu0
      %v1425 = vadd.f32 0.0, %v1424
      %v1426 = vpop.f32.mrb[0].mxu0
      %1427 = vdwg.mxu0
      %v1428 = vadd.f32 %v1207, %v1325
      %v1429 = vadd.f32 %v1208, %v1327
      %v1430 = vadd.f32 %v1209, %v1398
      %v1431 = vadd.f32 %v1210, %v1329
      %v1432 = vadd.f32 %v1211, %v1331
      %v1433 = vadd.f32 %v1212, %v1401
      %v1434 = vadd.f32 %v1213, %v1335
      %v1435 = vadd.f32 %v1214, %v1337
      %v1436 = vadd.f32 %v1215, %v1406
      %v1437 = vadd.f32 %v1216, %v1339
      %v1438 = vadd.f32 %v1217, %v1341
      %v1439 = vadd.f32 %v1218, %v1409
      %v1440 = vadd.f32 %v1219, %v1345
      %v1441 = vadd.f32 %v1220, %v1347
      %v1442 = vadd.f32 %v1221, %v1414
      %v1443 = vadd.f32 %v1222, %v1349
      %v1444 = vadd.f32 %v1223, %v1351
      %v1445 = vadd.f32 %v1224, %v1417
      %v1446 = vadd.f32 %v1225, %v1355
      %v1447 = vadd.f32 %v1226, %v1357
      %v1448 = vadd.f32 %v1227, %v1422
      %v1449 = vadd.f32 %v1228, %v1359
      %v1450 = vadd.f32 %v1229, %v1361
      %v1451 = vadd.f32 %v1230, %v1425
      %s1452 = scalar_lea.vmem %s1, 192
      %v1453 = vld [vmem:[%s1452] sm:$0xf]
      %v1454 = vld [vmem:[%s1452 + $0x4] sm:$0xf]
      %v1455 = vld [vmem:[%s1452 + $0x8] sm:$0xf]
      %v1456 = vld [vmem:[%s1452 + $0xc] sm:$0xf]
      %v1457 = vld [vmem:[%s1452 + $0x10] sm:$0xf]
      %v1458 = vld [vmem:[%s1452 + $0x14] sm:$0xf]
      %v1459 = vld [vmem:[%s1452 + $0x18] sm:$0xf]
      %v1460 = vld [vmem:[%s1452 + $0x1c] sm:$0xf]
      %v1469 = vunpack.c.l.b16 %v1453
      %v1470 = vunpack.c.l.b16 %v1454
      %v1471 = vunpack.c.l.b16 %v1455
      %v1472 = vunpack.c.l.b16 %v1456
      %v1473 = vunpack.c.l.b16 %v1457
      %v1474 = vunpack.c.l.b16 %v1458
      %v1475 = vunpack.c.l.b16 %v1459
      %v1476 = vunpack.c.l.b16 %v1460
      %v1477 = vpack.c.b16 %v1470, %v1469
      %v1478 = vpack.c.b16 %v1472, %v1471
      %v1479 = vpack.c.b16 %v1474, %v1473
      %v1480 = vpack.c.b16 %v1476, %v1475
      %1481 = vrot.lane.b32.xlu0 %v216, 92
      %v1482 = vpop.permute.xlu0 %1481
      %1483 = vrot.lane.b32.xlu0 %v217, 92
      %v1484 = vpop.permute.xlu0 %1483
      %1485 = vrot.lane.b32.xlu0 %v218, 92
      %v1486 = vpop.permute.xlu0 %1485
      %vm1487 = vcmask 752640
      %v1488 = vsel %vm1487, %v1482, %v1484
      %v1489 = vsel %vm1487, %v1484, %v1486
      %v1491 = vsel %vm228, %v1477, 0
      %v1494 = vsel %vm228, %v1478, 0
      %v1497 = vsel %vm228, %v1479, 0
      %v1500 = vsel %vm228, %v1480, 0
      %v1503 = vsel %vm241, %v1488, 0
      %v1506 = vsel %vm241, %v1489, 0
      %v1509 = vsel %vm241, %v1486, 0
      %1511 = vmatprep.subr.bf16.mxu0 %v1506
      %1512 = vmatpush1.bf16.msra.mxu0 %v1503
      %1513 = vmatprep.subr.bf16.mxu0 0
      %1514 = vmatpush1.bf16.msra.mxu0 0
      %1515 = vmatprep.subr.bf16.mxu0 0
      %1516 = vmatpush1.bf16.msra.mxu0 0
      %1517 = vmatprep.subr.bf16.mxu0 0
      %1518 = vmatpush1.bf16.msra.mxu0 0
      %1519 = vmatprep.subr.bf16.mxu0 0
      %1520 = vmatpush1.bf16.msra.mxu0 0
      %1521 = vmatprep.subr.bf16.mxu0 0
      %1522 = vmatpush1.bf16.msra.mxu0 0
      %1523 = vmatprep.subr.bf16.mxu0 0
      %1524 = vmatpush1.bf16.msra.mxu0 0
      %1525 = vmatprep.subr.bf16.mxu0 0
      %1526 = vmatpush1.bf16.msra.mxu0 0
      %1527 = vmatprep.subr.bf16.mxu0 0
      %1528 = vmatpush1.bf16.msra.mxu0 0
      %1529 = vmatprep.subr.bf16.mxu0 0
      %1530 = vmatpush1.bf16.msra.mxu0 0
      %1531 = vmatprep.subr.bf16.mxu0 0
      %1532 = vmatpush1.bf16.msra.mxu0 0
      %1533 = vmatprep.subr.bf16.mxu0 0
      %1534 = vmatpush1.bf16.msra.mxu0 0
      %1535 = vmatprep.subr.bf16.mxu0 0
      %1536 = vmatpush1.bf16.msra.mxu0 0
      %1537 = vmatprep.subr.bf16.mxu0 0
      %1538 = vmatpush1.bf16.msra.mxu0 0
      %1539 = vmatprep.subr.bf16.mxu0 0
      %1540 = vmatpush1.bf16.msra.mxu0 0
      %1541 = vmatprep.subr.bf16.mxu0 0
      %1542 = vmatpush1.bf16.msra.mxu0 0
      %1543 = vmatprep.mubr.bf16.mxu0 0
      %1544 = vmatmul.mubr.bf16.gmra.mrb[0].mxu0 %v1491
      %v1545 = vpop.f32.mrb[0].mxu0
      %v1546 = vadd.f32 0.0, %v1545
      %v1547 = vpop.f32.mrb[0].mxu0
      %v1548 = vadd.f32 0.0, %v1547
      %v1549 = vpop.f32.mrb[0].mxu0
      %v1550 = vadd.f32 0.0, %v1549
      %v1551 = vpop.f32.mrb[0].mxu0
      %v1552 = vadd.f32 0.0, %v1551
      %1553 = vmatprep.mubr.bf16.mxu0 0
      %1554 = vmatmul.mubr.bf16.gmra.mrb[0].mxu0 %v1494
      %v1555 = vpop.f32.mrb[0].mxu0
      %v1556 = vadd.f32 0.0, %v1555
      %v1557 = vpop.f32.mrb[0].mxu0
      %v1558 = vadd.f32 0.0, %v1557
      %v1559 = vpop.f32.mrb[0].mxu0
      %v1560 = vadd.f32 0.0, %v1559
      %v1561 = vpop.f32.mrb[0].mxu0
      %v1562 = vadd.f32 0.0, %v1561
      %1563 = vmatprep.mubr.bf16.mxu0 0
      %1564 = vmatmul.mubr.bf16.gmra.mrb[0].mxu0 %v1497
      %v1565 = vpop.f32.mrb[0].mxu0
      %v1566 = vadd.f32 0.0, %v1565
      %v1567 = vpop.f32.mrb[0].mxu0
      %v1568 = vadd.f32 0.0, %v1567
      %v1569 = vpop.f32.mrb[0].mxu0
      %v1570 = vadd.f32 0.0, %v1569
      %v1571 = vpop.f32.mrb[0].mxu0
      %v1572 = vadd.f32 0.0, %v1571
      %1573 = vmatprep.mubr.bf16.mxu0 0
      %1574 = vmatmul.mubr.bf16.gmra.mrb[0].mxu0 %v1500
      %v1575 = vpop.f32.mrb[0].mxu0
      %v1576 = vadd.f32 0.0, %v1575
      %v1577 = vpop.f32.mrb[0].mxu0
      %v1578 = vadd.f32 0.0, %v1577
      %v1579 = vpop.f32.mrb[0].mxu0
      %v1580 = vadd.f32 0.0, %v1579
      %v1581 = vpop.f32.mrb[0].mxu0
      %v1582 = vadd.f32 0.0, %v1581
      %1583 = vdwg.mxu0
      %1584 = vmatprep.subr.bf16.mxu0 0
      %1585 = vmatpush1.bf16.msra.mxu0 %v1509
      %1586 = vmatprep.subr.bf16.mxu0 0
      %1587 = vmatpush1.bf16.msra.mxu0 0
      %1588 = vmatprep.subr.bf16.mxu0 0
      %1589 = vmatpush1.bf16.msra.mxu0 0
      %1590 = vmatprep.subr.bf16.mxu0 0
      %1591 = vmatpush1.bf16.msra.mxu0 0
      %1592 = vmatprep.subr.bf16.mxu0 0
      %1593 = vmatpush1.bf16.msra.mxu0 0
      %1594 = vmatprep.subr.bf16.mxu0 0
      %1595 = vmatpush1.bf16.msra.mxu0 0
      %1596 = vmatprep.subr.bf16.mxu0 0
      %1597 = vmatpush1.bf16.msra.mxu0 0
      %1598 = vmatprep.subr.bf16.mxu0 0
      %1599 = vmatpush1.bf16.msra.mxu0 0
      %1600 = vmatprep.subr.bf16.mxu0 0
      %1601 = vmatpush1.bf16.msra.mxu0 0
      %1602 = vmatprep.subr.bf16.mxu0 0
      %1603 = vmatpush1.bf16.msra.mxu0 0
      %1604 = vmatprep.subr.bf16.mxu0 0
      %1605 = vmatpush1.bf16.msra.mxu0 0
      %1606 = vmatprep.subr.bf16.mxu0 0
      %1607 = vmatpush1.bf16.msra.mxu0 0
      %1608 = vmatprep.subr.bf16.mxu0 0
      %1609 = vmatpush1.bf16.msra.mxu0 0
      %1610 = vmatprep.subr.bf16.mxu0 0
      %1611 = vmatpush1.bf16.msra.mxu0 0
      %1612 = vmatprep.subr.bf16.mxu0 0
      %1613 = vmatpush1.bf16.msra.mxu0 0
      %1614 = vmatprep.subr.bf16.mxu0 0
      %1615 = vmatpush1.bf16.msra.mxu0 0
      %1616 = vmatprep.mubr.bf16.mxu0 0
      %1617 = vmatmul.mubr.bf16.gmra.mrb[0].mxu0 %v1491
      %v1618 = vpop.f32.mrb[0].mxu0
      %v1619 = vadd.f32 0.0, %v1618
      %v1620 = vpop.f32.mrb[0].mxu0
      %v1621 = vpop.f32.mrb[0].mxu0
      %v1622 = vadd.f32 0.0, %v1621
      %v1623 = vpop.f32.mrb[0].mxu0
      %1624 = vmatprep.mubr.bf16.mxu0 0
      %1625 = vmatmul.mubr.bf16.gmra.mrb[0].mxu0 %v1494
      %v1626 = vpop.f32.mrb[0].mxu0
      %v1627 = vadd.f32 0.0, %v1626
      %v1628 = vpop.f32.mrb[0].mxu0
      %v1629 = vpop.f32.mrb[0].mxu0
      %v1630 = vadd.f32 0.0, %v1629
      %v1631 = vpop.f32.mrb[0].mxu0
      %1632 = vmatprep.mubr.bf16.mxu0 0
      %1633 = vmatmul.mubr.bf16.gmra.mrb[0].mxu0 %v1497
      %v1634 = vpop.f32.mrb[0].mxu0
      %v1635 = vadd.f32 0.0, %v1634
      %v1636 = vpop.f32.mrb[0].mxu0
      %v1637 = vpop.f32.mrb[0].mxu0
      %v1638 = vadd.f32 0.0, %v1637
      %v1639 = vpop.f32.mrb[0].mxu0
      %1640 = vmatprep.mubr.bf16.mxu0 0
      %1641 = vmatmul.mubr.bf16.gmra.mrb[0].mxu0 %v1500
      %v1642 = vpop.f32.mrb[0].mxu0
      %v1643 = vadd.f32 0.0, %v1642
      %v1644 = vpop.f32.mrb[0].mxu0
      %v1645 = vpop.f32.mrb[0].mxu0
      %v1646 = vadd.f32 0.0, %v1645
      %v1647 = vpop.f32.mrb[0].mxu0
      %1648 = vdwg.mxu0
      %v1649 = vadd.f32 %v1428, %v1546
      %v1650 = vadd.f32 %v1429, %v1548
      %v1651 = vadd.f32 %v1430, %v1619
      %v1652 = vadd.f32 %v1431, %v1550
      %v1653 = vadd.f32 %v1432, %v1552
      %v1654 = vadd.f32 %v1433, %v1622
      %v1655 = vadd.f32 %v1434, %v1556
      %v1656 = vadd.f32 %v1435, %v1558
      %v1657 = vadd.f32 %v1436, %v1627
      %v1658 = vadd.f32 %v1437, %v1560
      %v1659 = vadd.f32 %v1438, %v1562
      %v1660 = vadd.f32 %v1439, %v1630
      %v1661 = vadd.f32 %v1440, %v1566
      %v1662 = vadd.f32 %v1441, %v1568
      %v1663 = vadd.f32 %v1442, %v1635
      %v1664 = vadd.f32 %v1443, %v1570
      %v1665 = vadd.f32 %v1444, %v1572
      %v1666 = vadd.f32 %v1445, %v1638
      %v1667 = vadd.f32 %v1446, %v1576
      %v1668 = vadd.f32 %v1447, %v1578
      %v1669 = vadd.f32 %v1448, %v1643
      %v1670 = vadd.f32 %v1449, %v1580
      %v1671 = vadd.f32 %v1450, %v1582
      %v1672 = vadd.f32 %v1451, %v1646
      %s1673 = scalar_lea.vmem %s1, 224
      %v1674 = vld [vmem:[%s1673] sm:$0xf]
      %v1675 = vld [vmem:[%s1673 + $0x4] sm:$0xf]
      %v1676 = vld [vmem:[%s1673 + $0x8] sm:$0xf]
      %v1677 = vld [vmem:[%s1673 + $0xc] sm:$0xf]
      %v1678 = vld [vmem:[%s1673 + $0x10] sm:$0xf]
      %v1679 = vld [vmem:[%s1673 + $0x14] sm:$0xf]
      %v1680 = vld [vmem:[%s1673 + $0x18] sm:$0xf]
      %v1681 = vld [vmem:[%s1673 + $0x1c] sm:$0xf]
      %v1690 = vunpack.c.l.b16 %v1674
      %v1691 = vunpack.c.l.b16 %v1675
      %v1692 = vunpack.c.l.b16 %v1676
      %v1693 = vunpack.c.l.b16 %v1677
      %v1694 = vunpack.c.l.b16 %v1678
      %v1695 = vunpack.c.l.b16 %v1679
      %v1696 = vunpack.c.l.b16 %v1680
      %v1697 = vunpack.c.l.b16 %v1681
      %v1698 = vpack.c.b16 %v1691, %v1690
      %v1699 = vpack.c.b16 %v1693, %v1692
      %v1700 = vpack.c.b16 %v1695, %v1694
      %v1701 = vpack.c.b16 %v1697, %v1696
      %1702 = vrot.lane.b32.xlu0 %v216, 91
      %v1703 = vpop.permute.xlu0 %1702
      %1704 = vrot.lane.b32.xlu0 %v217, 91
      %v1705 = vpop.permute.xlu0 %1704
      %1706 = vrot.lane.b32.xlu0 %v218, 91
      %v1707 = vpop.permute.xlu0 %1706
      %vm1708 = vcmask 744448
      %v1709 = vsel %vm1708, %v1703, %v1705
      %v1710 = vsel %vm1708, %v1705, %v1707
      %v1712 = vsel %vm228, %v1698, 0
      %v1715 = vsel %vm228, %v1699, 0
      %v1718 = vsel %vm228, %v1700, 0
      %v1721 = vsel %vm228, %v1701, 0
      %v1724 = vsel %vm241, %v1709, 0
      %v1727 = vsel %vm241, %v1710, 0
      %v1730 = vsel %vm241, %v1707, 0
      %1732 = vmatprep.subr.bf16.mxu0 %v1727
      %1733 = vmatpush1.bf16.msra.mxu0 %v1724
      %1734 = vmatprep.subr.bf16.mxu0 0
      %1735 = vmatpush1.bf16.msra.mxu0 0
      %1736 = vmatprep.subr.bf16.mxu0 0
      %1737 = vmatpush1.bf16.msra.mxu0 0
      %1738 = vmatprep.subr.bf16.mxu0 0
      %1739 = vmatpush1.bf16.msra.mxu0 0
      %1740 = vmatprep.subr.bf16.mxu0 0
      %1741 = vmatpush1.bf16.msra.mxu0 0
      %1742 = vmatprep.subr.bf16.mxu0 0
      %1743 = vmatpush1.bf16.msra.mxu0 0
      %1744 = vmatprep.subr.bf16.mxu0 0
      %1745 = vmatpush1.bf16.msra.mxu0 0
      %1746 = vmatprep.subr.bf16.mxu0 0
      %1747 = vmatpush1.bf16.msra.mxu0 0
      %1748 = vmatprep.subr.bf16.mxu0 0
      %1749 = vmatpush1.bf16.msra.mxu0 0
      %1750 = vmatprep.subr.bf16.mxu0 0
      %1751 = vmatpush1.bf16.msra.mxu0 0
      %1752 = vmatprep.subr.bf16.mxu0 0
      %1753 = vmatpush1.bf16.msra.mxu0 0
      %1754 = vmatprep.subr.bf16.mxu0 0
      %1755 = vmatpush1.bf16.msra.mxu0 0
      %1756 = vmatprep.subr.bf16.mxu0 0
      %1757 = vmatpush1.bf16.msra.mxu0 0
      %1758 = vmatprep.subr.bf16.mxu0 0
      %1759 = vmatpush1.bf16.msra.mxu0 0
      %1760 = vmatprep.subr.bf16.mxu0 0
      %1761 = vmatpush1.bf16.msra.mxu0 0
      %1762 = vmatprep.subr.bf16.mxu0 0
      %1763 = vmatpush1.bf16.msra.mxu0 0
      %1764 = vmatprep.mubr.bf16.mxu0 0
      %1765 = vmatmul.mubr.bf16.gmra.mrb[0].mxu0 %v1712
      %v1766 = vpop.f32.mrb[0].mxu0
      %v1767 = vadd.f32 0.0, %v1766
      %v1768 = vpop.f32.mrb[0].mxu0
      %v1769 = vadd.f32 0.0, %v1768
      %v1770 = vpop.f32.mrb[0].mxu0
      %v1771 = vadd.f32 0.0, %v1770
      %v1772 = vpop.f32.mrb[0].mxu0
      %v1773 = vadd.f32 0.0, %v1772
      %1774 = vmatprep.mubr.bf16.mxu0 0
      %1775 = vmatmul.mubr.bf16.gmra.mrb[0].mxu0 %v1715
      %v1776 = vpop.f32.mrb[0].mxu0
      %v1777 = vadd.f32 0.0, %v1776
      %v1778 = vpop.f32.mrb[0].mxu0
      %v1779 = vadd.f32 0.0, %v1778
      %v1780 = vpop.f32.mrb[0].mxu0
      %v1781 = vadd.f32 0.0, %v1780
      %v1782 = vpop.f32.mrb[0].mxu0
      %v1783 = vadd.f32 0.0, %v1782
      %1784 = vmatprep.mubr.bf16.mxu0 0
      %1785 = vmatmul.mubr.bf16.gmra.mrb[0].mxu0 %v1718
      %v1786 = vpop.f32.mrb[0].mxu0
      %v1787 = vadd.f32 0.0, %v1786
      %v1788 = vpop.f32.mrb[0].mxu0
      %v1789 = vadd.f32 0.0, %v1788
      %v1790 = vpop.f32.mrb[0].mxu0
      %v1791 = vadd.f32 0.0, %v1790
      %v1792 = vpop.f32.mrb[0].mxu0
      %v1793 = vadd.f32 0.0, %v1792
      %1794 = vmatprep.mubr.bf16.mxu0 0
      %1795 = vmatmul.mubr.bf16.gmra.mrb[0].mxu0 %v1721
      %v1796 = vpop.f32.mrb[0].mxu0
      %v1797 = vadd.f32 0.0, %v1796
      %v1798 = vpop.f32.mrb[0].mxu0
      %v1799 = vadd.f32 0.0, %v1798
      %v1800 = vpop.f32.mrb[0].mxu0
      %v1801 = vadd.f32 0.0, %v1800
      %v1802 = vpop.f32.mrb[0].mxu0
      %v1803 = vadd.f32 0.0, %v1802
      %1804 = vdwg.mxu0
      %1805 = vmatprep.subr.bf16.mxu0 0
      %1806 = vmatpush1.bf16.msra.mxu0 %v1730
      %1807 = vmatprep.subr.bf16.mxu0 0
      %1808 = vmatpush1.bf16.msra.mxu0 0
      %1809 = vmatprep.subr.bf16.mxu0 0
      %1810 = vmatpush1.bf16.msra.mxu0 0
      %1811 = vmatprep.subr.bf16.mxu0 0
      %1812 = vmatpush1.bf16.msra.mxu0 0
      %1813 = vmatprep.subr.bf16.mxu0 0
      %1814 = vmatpush1.bf16.msra.mxu0 0
      %1815 = vmatprep.subr.bf16.mxu0 0
      %1816 = vmatpush1.bf16.msra.mxu0 0
      %1817 = vmatprep.subr.bf16.mxu0 0
      %1818 = vmatpush1.bf16.msra.mxu0 0
      %1819 = vmatprep.subr.bf16.mxu0 0
      %1820 = vmatpush1.bf16.msra.mxu0 0
      %1821 = vmatprep.subr.bf16.mxu0 0
      %1822 = vmatpush1.bf16.msra.mxu0 0
      %1823 = vmatprep.subr.bf16.mxu0 0
      %1824 = vmatpush1.bf16.msra.mxu0 0
      %1825 = vmatprep.subr.bf16.mxu0 0
      %1826 = vmatpush1.bf16.msra.mxu0 0
      %1827 = vmatprep.subr.bf16.mxu0 0
      %1828 = vmatpush1.bf16.msra.mxu0 0
      %1829 = vmatprep.subr.bf16.mxu0 0
      %1830 = vmatpush1.bf16.msra.mxu0 0
      %1831 = vmatprep.subr.bf16.mxu0 0
      %1832 = vmatpush1.bf16.msra.mxu0 0
      %1833 = vmatprep.subr.bf16.mxu0 0
      %1834 = vmatpush1.bf16.msra.mxu0 0
      %1835 = vmatprep.subr.bf16.mxu0 0
      %1836 = vmatpush1.bf16.msra.mxu0 0
      %1837 = vmatprep.mubr.bf16.mxu0 0
      %1838 = vmatmul.mubr.bf16.gmra.mrb[0].mxu0 %v1712
      %v1839 = vpop.f32.mrb[0].mxu0
      %v1840 = vadd.f32 0.0, %v1839
      %v1841 = vpop.f32.mrb[0].mxu0
      %v1842 = vpop.f32.mrb[0].mxu0
      %v1843 = vadd.f32 0.0, %v1842
      %v1844 = vpop.f32.mrb[0].mxu0
      %1845 = vmatprep.mubr.bf16.mxu0 0
      %1846 = vmatmul.mubr.bf16.gmra.mrb[0].mxu0 %v1715
      %v1847 = vpop.f32.mrb[0].mxu0
      %v1848 = vadd.f32 0.0, %v1847
      %v1849 = vpop.f32.mrb[0].mxu0
      %v1850 = vpop.f32.mrb[0].mxu0
      %v1851 = vadd.f32 0.0, %v1850
      %v1852 = vpop.f32.mrb[0].mxu0
      %1853 = vmatprep.mubr.bf16.mxu0 0
      %1854 = vmatmul.mubr.bf16.gmra.mrb[0].mxu0 %v1718
      %v1855 = vpop.f32.mrb[0].mxu0
      %v1856 = vadd.f32 0.0, %v1855
      %v1857 = vpop.f32.mrb[0].mxu0
      %v1858 = vpop.f32.mrb[0].mxu0
      %v1859 = vadd.f32 0.0, %v1858
      %v1860 = vpop.f32.mrb[0].mxu0
      %1861 = vmatprep.mubr.bf16.mxu0 0
      %1862 = vmatmul.mubr.bf16.gmra.mrb[0].mxu0 %v1721
      %v1863 = vpop.f32.mrb[0].mxu0
      %v1864 = vadd.f32 0.0, %v1863
      %v1865 = vpop.f32.mrb[0].mxu0
      %v1866 = vpop.f32.mrb[0].mxu0
      %v1867 = vadd.f32 0.0, %v1866
      %v1868 = vpop.f32.mrb[0].mxu0
      %1869 = vdwg.mxu0
      %v1870 = vadd.f32 %v1649, %v1767
      %v1871 = vadd.f32 %v1650, %v1769
      %v1872 = vadd.f32 %v1651, %v1840
      %v1873 = vadd.f32 %v1652, %v1771
      %v1874 = vadd.f32 %v1653, %v1773
      %v1875 = vadd.f32 %v1654, %v1843
      %v1876 = vadd.f32 %v1655, %v1777
      %v1877 = vadd.f32 %v1656, %v1779
      %v1878 = vadd.f32 %v1657, %v1848
      %v1879 = vadd.f32 %v1658, %v1781
      %v1880 = vadd.f32 %v1659, %v1783
      %v1881 = vadd.f32 %v1660, %v1851
      %v1882 = vadd.f32 %v1661, %v1787
      %v1883 = vadd.f32 %v1662, %v1789
      %v1884 = vadd.f32 %v1663, %v1856
      %v1885 = vadd.f32 %v1664, %v1791
      %v1886 = vadd.f32 %v1665, %v1793
      %v1887 = vadd.f32 %v1666, %v1859
      %v1888 = vadd.f32 %v1667, %v1797
      %v1889 = vadd.f32 %v1668, %v1799
      %v1890 = vadd.f32 %v1669, %v1864
      %v1891 = vadd.f32 %v1670, %v1801
      %v1892 = vadd.f32 %v1671, %v1803
      %v1893 = vadd.f32 %v1672, %v1867
      %s1894 = scalar_lea.vmem %s1, 256
      %v1895 = vld [vmem:[%s1894] sm:$0xf]
      %v1896 = vld [vmem:[%s1894 + $0x4] sm:$0xf]
      %v1897 = vld [vmem:[%s1894 + $0x8] sm:$0xf]
      %v1898 = vld [vmem:[%s1894 + $0xc] sm:$0xf]
      %v1899 = vld [vmem:[%s1894 + $0x10] sm:$0xf]
      %v1900 = vld [vmem:[%s1894 + $0x14] sm:$0xf]
      %v1901 = vld [vmem:[%s1894 + $0x18] sm:$0xf]
      %v1902 = vld [vmem:[%s1894 + $0x1c] sm:$0xf]
      %v1911 = vunpack.c.l.b16 %v1895
      %v1912 = vunpack.c.l.b16 %v1896
      %v1913 = vunpack.c.l.b16 %v1897
      %v1914 = vunpack.c.l.b16 %v1898
      %v1915 = vunpack.c.l.b16 %v1899
      %v1916 = vunpack.c.l.b16 %v1900
      %v1917 = vunpack.c.l.b16 %v1901
      %v1918 = vunpack.c.l.b16 %v1902
      %v1919 = vpack.c.b16 %v1912, %v1911
      %v1920 = vpack.c.b16 %v1914, %v1913
      %v1921 = vpack.c.b16 %v1916, %v1915
      %v1922 = vpack.c.b16 %v1918, %v1917
      %1923 = vrot.lane.b32.xlu0 %v216, 90
      %v1924 = vpop.permute.xlu0 %1923
      %1925 = vrot.lane.b32.xlu0 %v217, 90
      %v1926 = vpop.permute.xlu0 %1925
      %1927 = vrot.lane.b32.xlu0 %v218, 90
      %v1928 = vpop.permute.xlu0 %1927
      %vm1929 = vcmask 736256
      %v1930 = vsel %vm1929, %v1924, %v1926
      %v1931 = vsel %vm1929, %v1926, %v1928
      %v1933 = vsel %vm228, %v1919, 0
      %v1936 = vsel %vm228, %v1920, 0
      %v1939 = vsel %vm228, %v1921, 0
      %v1942 = vsel %vm228, %v1922, 0
      %v1945 = vsel %vm241, %v1930, 0
      %v1948 = vsel %vm241, %v1931, 0
      %v1951 = vsel %vm241, %v1928, 0
      %1953 = vmatprep.subr.bf16.mxu0 %v1948
      %1954 = vmatpush1.bf16.msra.mxu0 %v1945
      %1955 = vmatprep.subr.bf16.mxu0 0
      %1956 = vmatpush1.bf16.msra.mxu0 0
      %1957 = vmatprep.subr.bf16.mxu0 0
      %1958 = vmatpush1.bf16.msra.mxu0 0
      %1959 = vmatprep.subr.bf16.mxu0 0
      %1960 = vmatpush1.bf16.msra.mxu0 0
      %1961 = vmatprep.subr.bf16.mxu0 0
      %1962 = vmatpush1.bf16.msra.mxu0 0
      %1963 = vmatprep.subr.bf16.mxu0 0
      %1964 = vmatpush1.bf16.msra.mxu0 0
      %1965 = vmatprep.subr.bf16.mxu0 0
      %1966 = vmatpush1.bf16.msra.mxu0 0
      %1967 = vmatprep.subr.bf16.mxu0 0
      %1968 = vmatpush1.bf16.msra.mxu0 0
      %1969 = vmatprep.subr.bf16.mxu0 0
      %1970 = vmatpush1.bf16.msra.mxu0 0
      %1971 = vmatprep.subr.bf16.mxu0 0
      %1972 = vmatpush1.bf16.msra.mxu0 0
      %1973 = vmatprep.subr.bf16.mxu0 0
      %1974 = vmatpush1.bf16.msra.mxu0 0
      %1975 = vmatprep.subr.bf16.mxu0 0
      %1976 = vmatpush1.bf16.msra.mxu0 0
      %1977 = vmatprep.subr.bf16.mxu0 0
      %1978 = vmatpush1.bf16.msra.mxu0 0
      %1979 = vmatprep.subr.bf16.mxu0 0
      %1980 = vmatpush1.bf16.msra.mxu0 0
      %1981 = vmatprep.subr.bf16.mxu0 0
      %1982 = vmatpush1.bf16.msra.mxu0 0
      %1983 = vmatprep.subr.bf16.mxu0 0
      %1984 = vmatpush1.bf16.msra.mxu0 0
      %1985 = vmatprep.mubr.bf16.mxu0 0
      %1986 = vmatmul.mubr.bf16.gmra.mrb[0].mxu0 %v1933
      %v1987 = vpop.f32.mrb[0].mxu0
      %v1988 = vadd.f32 0.0, %v1987
      %v1989 = vpop.f32.mrb[0].mxu0
      %v1990 = vadd.f32 0.0, %v1989
      %v1991 = vpop.f32.mrb[0].mxu0
      %v1992 = vadd.f32 0.0, %v1991
      %v1993 = vpop.f32.mrb[0].mxu0
      %v1994 = vadd.f32 0.0, %v1993
      %1995 = vmatprep.mubr.bf16.mxu0 0
      %1996 = vmatmul.mubr.bf16.gmra.mrb[0].mxu0 %v1936
      %v1997 = vpop.f32.mrb[0].mxu0
      %v1998 = vadd.f32 0.0, %v1997
      %v1999 = vpop.f32.mrb[0].mxu0
      %v2000 = vadd.f32 0.0, %v1999
      %v2001 = vpop.f32.mrb[0].mxu0
      %v2002 = vadd.f32 0.0, %v2001
      %v2003 = vpop.f32.mrb[0].mxu0
      %v2004 = vadd.f32 0.0, %v2003
      %2005 = vmatprep.mubr.bf16.mxu0 0
      %2006 = vmatmul.mubr.bf16.gmra.mrb[0].mxu0 %v1939
      %v2007 = vpop.f32.mrb[0].mxu0
      %v2008 = vadd.f32 0.0, %v2007
      %v2009 = vpop.f32.mrb[0].mxu0
      %v2010 = vadd.f32 0.0, %v2009
      %v2011 = vpop.f32.mrb[0].mxu0
      %v2012 = vadd.f32 0.0, %v2011
      %v2013 = vpop.f32.mrb[0].mxu0
      %v2014 = vadd.f32 0.0, %v2013
      %2015 = vmatprep.mubr.bf16.mxu0 0
      %2016 = vmatmul.mubr.bf16.gmra.mrb[0].mxu0 %v1942
      %v2017 = vpop.f32.mrb[0].mxu0
      %v2018 = vadd.f32 0.0, %v2017
      %v2019 = vpop.f32.mrb[0].mxu0
      %v2020 = vadd.f32 0.0, %v2019
      %v2021 = vpop.f32.mrb[0].mxu0
      %v2022 = vadd.f32 0.0, %v2021
      %v2023 = vpop.f32.mrb[0].mxu0
      %v2024 = vadd.f32 0.0, %v2023
      %2025 = vdwg.mxu0
      %2026 = vmatprep.subr.bf16.mxu0 0
      %2027 = vmatpush1.bf16.msra.mxu0 %v1951
      %2028 = vmatprep.subr.bf16.mxu0 0
      %2029 = vmatpush1.bf16.msra.mxu0 0
      %2030 = vmatprep.subr.bf16.mxu0 0
      %2031 = vmatpush1.bf16.msra.mxu0 0
      %2032 = vmatprep.subr.bf16.mxu0 0
      %2033 = vmatpush1.bf16.msra.mxu0 0
      %2034 = vmatprep.subr.bf16.mxu0 0
      %2035 = vmatpush1.bf16.msra.mxu0 0
      %2036 = vmatprep.subr.bf16.mxu0 0
      %2037 = vmatpush1.bf16.msra.mxu0 0
      %2038 = vmatprep.subr.bf16.mxu0 0
      %2039 = vmatpush1.bf16.msra.mxu0 0
      %2040 = vmatprep.subr.bf16.mxu0 0
      %2041 = vmatpush1.bf16.msra.mxu0 0
      %2042 = vmatprep.subr.bf16.mxu0 0
      %2043 = vmatpush1.bf16.msra.mxu0 0
      %2044 = vmatprep.subr.bf16.mxu0 0
      %2045 = vmatpush1.bf16.msra.mxu0 0
      %2046 = vmatprep.subr.bf16.mxu0 0
      %2047 = vmatpush1.bf16.msra.mxu0 0
      %2048 = vmatprep.subr.bf16.mxu0 0
      %2049 = vmatpush1.bf16.msra.mxu0 0
      %2050 = vmatprep.subr.bf16.mxu0 0
      %2051 = vmatpush1.bf16.msra.mxu0 0
      %2052 = vmatprep.subr.bf16.mxu0 0
      %2053 = vmatpush1.bf16.msra.mxu0 0
      %2054 = vmatprep.subr.bf16.mxu0 0
      %2055 = vmatpush1.bf16.msra.mxu0 0
      %2056 = vmatprep.subr.bf16.mxu0 0
      %2057 = vmatpush1.bf16.msra.mxu0 0
      %2058 = vmatprep.mubr.bf16.mxu0 0
      %2059 = vmatmul.mubr.bf16.gmra.mrb[0].mxu0 %v1933
      %v2060 = vpop.f32.mrb[0].mxu0
      %v2061 = vadd.f32 0.0, %v2060
      %v2062 = vpop.f32.mrb[0].mxu0
      %v2063 = vpop.f32.mrb[0].mxu0
      %v2064 = vadd.f32 0.0, %v2063
      %v2065 = vpop.f32.mrb[0].mxu0
      %2066 = vmatprep.mubr.bf16.mxu0 0
      %2067 = vmatmul.mubr.bf16.gmra.mrb[0].mxu0 %v1936
      %v2068 = vpop.f32.mrb[0].mxu0
      %v2069 = vadd.f32 0.0, %v2068
      %v2070 = vpop.f32.mrb[0].mxu0
      %v2071 = vpop.f32.mrb[0].mxu0
      %v2072 = vadd.f32 0.0, %v2071
      %v2073 = vpop.f32.mrb[0].mxu0
      %2074 = vmatprep.mubr.bf16.mxu0 0
      %2075 = vmatmul.mubr.bf16.gmra.mrb[0].mxu0 %v1939
      %v2076 = vpop.f32.mrb[0].mxu0
      %v2077 = vadd.f32 0.0, %v2076
      %v2078 = vpop.f32.mrb[0].mxu0
      %v2079 = vpop.f32.mrb[0].mxu0
      %v2080 = vadd.f32 0.0, %v2079
      %v2081 = vpop.f32.mrb[0].mxu0
      %2082 = vmatprep.mubr.bf16.mxu0 0
      %2083 = vmatmul.mubr.bf16.gmra.mrb[0].mxu0 %v1942
      %v2084 = vpop.f32.mrb[0].mxu0
      %v2085 = vadd.f32 0.0, %v2084
      %v2086 = vpop.f32.mrb[0].mxu0
      %v2087 = vpop.f32.mrb[0].mxu0
      %v2088 = vadd.f32 0.0, %v2087
      %v2089 = vpop.f32.mrb[0].mxu0
      %2090 = vdwg.mxu0
      %v2091 = vadd.f32 %v1870, %v1988
      %v2092 = vadd.f32 %v1871, %v1990
      %v2093 = vadd.f32 %v1872, %v2061
      %v2094 = vadd.f32 %v1873, %v1992
      %v2095 = vadd.f32 %v1874, %v1994
      %v2096 = vadd.f32 %v1875, %v2064
      %v2097 = vadd.f32 %v1876, %v1998
      %v2098 = vadd.f32 %v1877, %v2000
      %v2099 = vadd.f32 %v1878, %v2069
      %v2100 = vadd.f32 %v1879, %v2002
      %v2101 = vadd.f32 %v1880, %v2004
      %v2102 = vadd.f32 %v1881, %v2072
      %v2103 = vadd.f32 %v1882, %v2008
      %v2104 = vadd.f32 %v1883, %v2010
      %v2105 = vadd.f32 %v1884, %v2077
      %v2106 = vadd.f32 %v1885, %v2012
      %v2107 = vadd.f32 %v1886, %v2014
      %v2108 = vadd.f32 %v1887, %v2080
      %v2109 = vadd.f32 %v1888, %v2018
      %v2110 = vadd.f32 %v1889, %v2020
      %v2111 = vadd.f32 %v1890, %v2085
      %v2112 = vadd.f32 %v1891, %v2022
      %v2113 = vadd.f32 %v1892, %v2024
      %v2114 = vadd.f32 %v1893, %v2088
      %v2115 = vld [vmem:[%s2] sm:$0xff]
      %v2116 = vld [vmem:[%s2 + $0x8] sm:$0xff]
      %v2117 = vld [vmem:[%s2 + $0x10] sm:$0xff]
      %v2118 = vld [vmem:[%s2 + $0x18] sm:$0xff]
      %v2119 = vld [vmem:[%s2 + $0x20] sm:$0xff]
      %v2120 = vld [vmem:[%s2 + $0x28] sm:$0xff]
      %v2121 = vld [vmem:[%s2 + $0x30] sm:$0xff]
      %v2122 = vld [vmem:[%s2 + $0x38] sm:$0xff]
      %2124 = vset.pattern.permute.xlu0 0
      %2125 = vperm.xlu0 %2124, %v2115
      %v2126 = vpop.permute.xlu0 %2125
      %2129 = vset.pattern.permute.xlu0 0
      %2130 = vperm.xlu0 %2129, %v2116
      %v2131 = vpop.permute.xlu0 %2130
      %2134 = vset.pattern.permute.xlu0 0
      %2135 = vperm.xlu0 %2134, %v2117
      %v2136 = vpop.permute.xlu0 %2135
      %2139 = vset.pattern.permute.xlu0 0
      %2140 = vperm.xlu0 %2139, %v2118
      %v2141 = vpop.permute.xlu0 %2140
      %2144 = vset.pattern.permute.xlu0 0
      %2145 = vperm.xlu0 %2144, %v2119
      %v2146 = vpop.permute.xlu0 %2145
      %2149 = vset.pattern.permute.xlu0 0
      %2150 = vperm.xlu0 %2149, %v2120
      %v2151 = vpop.permute.xlu0 %2150
      %2154 = vset.pattern.permute.xlu0 0
      %2155 = vperm.xlu0 %2154, %v2121
      %v2156 = vpop.permute.xlu0 %2155
      %2159 = vset.pattern.permute.xlu0 0
      %2160 = vperm.xlu0 %2159, %v2122
      %v2161 = vpop.permute.xlu0 %2160
      %v2163 = vadd.f32 %v2091, %v2126
      %v2164 = vadd.f32 %v2092, %v2126
      %v2165 = vadd.f32 %v2093, %v2126
      %v2166 = vadd.f32 %v2094, %v2131
      %v2167 = vadd.f32 %v2095, %v2131
      %v2168 = vadd.f32 %v2096, %v2131
      %v2169 = vadd.f32 %v2097, %v2136
      %v2170 = vadd.f32 %v2098, %v2136
      %v2171 = vadd.f32 %v2099, %v2136
      %v2172 = vadd.f32 %v2100, %v2141
      %v2173 = vadd.f32 %v2101, %v2141
      %v2174 = vadd.f32 %v2102, %v2141
      %v2175 = vadd.f32 %v2103, %v2146
      %v2176 = vadd.f32 %v2104, %v2146
      %v2177 = vadd.f32 %v2105, %v2146
      %v2178 = vadd.f32 %v2106, %v2151
      %v2179 = vadd.f32 %v2107, %v2151
      %v2180 = vadd.f32 %v2108, %v2151
      %v2181 = vadd.f32 %v2109, %v2156
      %v2182 = vadd.f32 %v2110, %v2156
      %v2183 = vadd.f32 %v2111, %v2156
      %v2184 = vadd.f32 %v2112, %v2161
      %v2185 = vadd.f32 %v2113, %v2161
      %v2186 = vadd.f32 %v2114, %v2161
      %vm2187 = vcmp.ge.f32.partialorder %v2163, 0.0
      %vm2188 = vcmp.ge.f32.partialorder %v2164, 0.0
      %vm2189 = vcmp.ge.f32.partialorder %v2165, 0.0
      %vm2190 = vcmp.ge.f32.partialorder %v2166, 0.0
      %vm2191 = vcmp.ge.f32.partialorder %v2167, 0.0
      %vm2192 = vcmp.ge.f32.partialorder %v2168, 0.0
      %vm2193 = vcmp.ge.f32.partialorder %v2169, 0.0
      %vm2194 = vcmp.ge.f32.partialorder %v2170, 0.0
      %vm2195 = vcmp.ge.f32.partialorder %v2171, 0.0
      %vm2196 = vcmp.ge.f32.partialorder %v2172, 0.0
      %vm2197 = vcmp.ge.f32.partialorder %v2173, 0.0
      %vm2198 = vcmp.ge.f32.partialorder %v2174, 0.0
      %vm2199 = vcmp.ge.f32.partialorder %v2175, 0.0
      %vm2200 = vcmp.ge.f32.partialorder %v2176, 0.0
      %vm2201 = vcmp.ge.f32.partialorder %v2177, 0.0
      %vm2202 = vcmp.ge.f32.partialorder %v2178, 0.0
      %vm2203 = vcmp.ge.f32.partialorder %v2179, 0.0
      %vm2204 = vcmp.ge.f32.partialorder %v2180, 0.0
      %vm2205 = vcmp.ge.f32.partialorder %v2181, 0.0
      %vm2206 = vcmp.ge.f32.partialorder %v2182, 0.0
      %vm2207 = vcmp.ge.f32.partialorder %v2183, 0.0
      %vm2208 = vcmp.ge.f32.partialorder %v2184, 0.0
      %vm2209 = vcmp.ge.f32.partialorder %v2185, 0.0
      %vm2210 = vcmp.ge.f32.partialorder %v2186, 0.0
      %v2211 = vmul.f32 %v2163, 0.2
      %v2212 = vmul.f32 %v2164, 0.2
      %v2213 = vmul.f32 %v2165, 0.2
      %v2214 = vmul.f32 %v2166, 0.2
      %v2215 = vmul.f32 %v2167, 0.2
      %v2216 = vmul.f32 %v2168, 0.2
      %v2217 = vmul.f32 %v2169, 0.2
      %v2218 = vmul.f32 %v2170, 0.2
      %v2219 = vmul.f32 %v2171, 0.2
      %v2220 = vmul.f32 %v2172, 0.2
      %v2221 = vmul.f32 %v2173, 0.2
      %v2222 = vmul.f32 %v2174, 0.2
      %v2223 = vmul.f32 %v2175, 0.2
      %v2224 = vmul.f32 %v2176, 0.2
      %v2225 = vmul.f32 %v2177, 0.2
      %v2226 = vmul.f32 %v2178, 0.2
      %v2227 = vmul.f32 %v2179, 0.2
      %v2228 = vmul.f32 %v2180, 0.2
      %v2229 = vmul.f32 %v2181, 0.2
      %v2230 = vmul.f32 %v2182, 0.2
      %v2231 = vmul.f32 %v2183, 0.2
      %v2232 = vmul.f32 %v2184, 0.2
      %v2233 = vmul.f32 %v2185, 0.2
      %v2234 = vmul.f32 %v2186, 0.2
      %v2235 = vsel %vm2187, %v2163, %v2211
      %v2236 = vsel %vm2188, %v2164, %v2212
      %v2237 = vsel %vm2189, %v2165, %v2213
      %v2238 = vsel %vm2190, %v2166, %v2214
      %v2239 = vsel %vm2191, %v2167, %v2215
      %v2240 = vsel %vm2192, %v2168, %v2216
      %v2241 = vsel %vm2193, %v2169, %v2217
      %v2242 = vsel %vm2194, %v2170, %v2218
      %v2243 = vsel %vm2195, %v2171, %v2219
      %v2244 = vsel %vm2196, %v2172, %v2220
      %v2245 = vsel %vm2197, %v2173, %v2221
      %v2246 = vsel %vm2198, %v2174, %v2222
      %v2247 = vsel %vm2199, %v2175, %v2223
      %v2248 = vsel %vm2200, %v2176, %v2224
      %v2249 = vsel %vm2201, %v2177, %v2225
      %v2250 = vsel %vm2202, %v2178, %v2226
      %v2251 = vsel %vm2203, %v2179, %v2227
      %v2252 = vsel %vm2204, %v2180, %v2228
      %v2253 = vsel %vm2205, %v2181, %v2229
      %v2254 = vsel %vm2206, %v2182, %v2230
      %v2255 = vsel %vm2207, %v2183, %v2231
      %v2256 = vsel %vm2208, %v2184, %v2232
      %v2257 = vsel %vm2209, %v2185, %v2233
      %v2258 = vsel %vm2210, %v2186, %v2234
      %v2259 = vpack.c.bf16 %v2238, %v2235
      %v2260 = vpack.c.bf16 %v2239, %v2236
      %v2261 = vpack.c.bf16 %v2240, %v2237
      %v2262 = vpack.c.bf16 %v2244, %v2241
      %v2263 = vpack.c.bf16 %v2245, %v2242
      %v2264 = vpack.c.bf16 %v2246, %v2243
      %v2265 = vpack.c.bf16 %v2250, %v2247
      %v2266 = vpack.c.bf16 %v2251, %v2248
      %v2267 = vpack.c.bf16 %v2252, %v2249
      %v2268 = vpack.c.bf16 %v2256, %v2253
      %v2269 = vpack.c.bf16 %v2257, %v2254
      %v2270 = vpack.c.bf16 %v2258, %v2255
      %v2283 = vunpack.c.l.b16 %v2259
      %v2284 = vunpack.c.l.b16 %v2260
      %v2285 = vunpack.c.l.b16 %v2261
      %v2286 = vunpack.c.h.b16 %v2259
      %v2287 = vunpack.c.h.b16 %v2260
      %v2288 = vunpack.c.h.b16 %v2261
      %v2289 = vunpack.c.l.b16 %v2262
      %v2290 = vunpack.c.l.b16 %v2263
      %v2291 = vunpack.c.l.b16 %v2264
      %v2292 = vunpack.c.h.b16 %v2262
      %v2293 = vunpack.c.h.b16 %v2263
      %v2294 = vunpack.c.h.b16 %v2264
      %v2295 = vunpack.c.l.b16 %v2265
      %v2296 = vunpack.c.l.b16 %v2266
      %v2297 = vunpack.c.l.b16 %v2267
      %v2298 = vunpack.c.h.b16 %v2265
      %v2299 = vunpack.c.h.b16 %v2266
      %v2300 = vunpack.c.h.b16 %v2267
      %v2301 = vunpack.c.l.b16 %v2268
      %v2302 = vunpack.c.l.b16 %v2269
      %v2303 = vunpack.c.l.b16 %v2270
      %v2304 = vunpack.c.h.b16 %v2268
      %v2305 = vunpack.c.h.b16 %v2269
      %v2306 = vunpack.c.h.b16 %v2270
      %v2307 = vpack.c.b16 %v2284, %v2283
      %v2308 = vpack.c.b16 %v2285, %v2285
      %v2309 = vpack.c.b16 %v2287, %v2286
      %v2310 = vpack.c.b16 %v2288, %v2288
      %v2311 = vpack.c.b16 %v2290, %v2289
      %v2312 = vpack.c.b16 %v2291, %v2291
      %v2313 = vpack.c.b16 %v2293, %v2292
      %v2314 = vpack.c.b16 %v2294, %v2294
      %v2315 = vpack.c.b16 %v2296, %v2295
      %v2316 = vpack.c.b16 %v2297, %v2297
      %v2317 = vpack.c.b16 %v2299, %v2298
      %v2318 = vpack.c.b16 %v2300, %v2300
      %v2319 = vpack.c.b16 %v2302, %v2301
      %v2320 = vpack.c.b16 %v2303, %v2303
      %v2321 = vpack.c.b16 %v2305, %v2304
      %v2322 = vpack.c.b16 %v2306, %v2306
      %2339 = vst [vmem:[%s170] sm:$0xff] %v2307
      %vm2340 = vcmask 257024
      %2341 = vst.msk [vmem:[%s170 + $0x8] sm:$0xf] %vm2340, %v2308
      %2342 = vst [vmem:[%s170 + $0xc] sm:$0xff] %v2309
      %2343 = vst.msk [vmem:[%s170 + $0x14] sm:$0xf] %vm2340, %v2310
      %2344 = vst [vmem:[%s170 + $0x18] sm:$0xff] %v2311
      %2345 = vst.msk [vmem:[%s170 + $0x20] sm:$0xf] %vm2340, %v2312
      %2346 = vst [vmem:[%s170 + $0x24] sm:$0xff] %v2313
      %2347 = vst.msk [vmem:[%s170 + $0x2c] sm:$0xf] %vm2340, %v2314
      %2348 = vst [vmem:[%s170 + $0x30] sm:$0xff] %v2315
      %2349 = vst.msk [vmem:[%s170 + $0x38] sm:$0xf] %vm2340, %v2316
      %2350 = vst [vmem:[%s170 + $0x3c] sm:$0xff] %v2317
      %2351 = vst.msk [vmem:[%s170 + $0x44] sm:$0xf] %vm2340, %v2318
      %2352 = vst [vmem:[%s170 + $0x48] sm:$0xff] %v2319
      %2353 = vst.msk [vmem:[%s170 + $0x50] sm:$0xf] %vm2340, %v2320
      %2354 = vst [vmem:[%s170 + $0x54] sm:$0xff] %v2321
      %2355 = vst.msk [vmem:[%s170 + $0x5c] sm:$0xf] %vm2340, %v2322
      %p2356 = scmp.lt.s32.totalorder %s14, 1
      %s2357 = scalar_select %p2356, %s14, 1
      %s2358 = smul.addr %s2357, 24
      %s2359 = smul.addr %s2358, 4
      %s2360 = scalar_lea.vmem %s3, %s2359
      // Predicated region
      $region33: #{conv2d.1} parent=31 // pred_check
        %p2361 = pneg %p100
      $region34: #{conv2d.1} parent=31 // pred_check_branch
        %2363 = sbr.rel (%p2361) target = $region36
      $region35: #{conv2d.1} parent=31 // pred_region
        _
      $region36: #{conv2d.1} parent=31 // pred_fallthru
        _
    $region32: #{conv2d.1} parent=5 // pred_fallthru
      _
    %p2364 = scmp.le.s32.totalorder 2, %s9
    // Predicated region
    $region37: #{conv2d.1} parent=5 // pred_check
      %p2365 = pneg %p2364
    $region38: #{conv2d.1} parent=5 // pred_check_branch
      %2367 = sbr.rel (%p2365) target = $region40
    $region39: #{conv2d.1} parent=5 // pred_region
      %s2368 = ssub.s32 %s9, 2
      // Predicated region
      $region41: #{conv2d.1} parent=39 // pred_check
        %p2369 = pneg %p106
      $region42: #{conv2d.1} parent=39 // pred_check_branch
        %2371 = sbr.rel (%p2369) target = $region44
      $region43: #{conv2d.1} parent=39 // pred_region
        %p2372 = scmp.lt.s32.totalorder %s15, 1
        %s2373 = scalar_select %p2372, %s15, 1
        %s2374 = smul.addr %s2373, 24
        %s2375 = smul.addr %s2374, 4
        %s2376 = scalar_lea.vmem %s3, %s2375
      $region44: #{conv2d.1} parent=39 // pred_fallthru
        _
    $region40: #{conv2d.1} parent=5 // pred_fallthru
      _
  $region6: #{conv2d.1} parent=0 // loop_footer
    %s13 = sadd.s32 1, %s9
  $region7: #{conv2d.1} parent=0 // loop_footer_branch
    %8 = sbr.rel target = $region3
  $region8: #{conv2d.1} parent=0 // loop_exit
    _

</llo_original>
